<compile_context>
chip_gen: v5e
topology: v5e:2x2
jax: 0.10.0
libtpu: 0.0.40
codegen_flags: <defaults>
</compile_context>

<pallas_src>
import functools

import jax
import jax.numpy as jnp
from jax.experimental import pallas as pl
from jax.experimental.pallas import tpu as pltpu


def _round_up(x, m):
    return ((x + m - 1) // m) * m


def _elu(x):
    # ELU(alpha=1). The negative branch needs expm1-grade accuracy near 0, so use a
    # short Taylor series there and exp(x)-1 further out; only relies on the EUP exp.
    poly = x * (1.0 + x * (0.5 + x * (1.0 / 6.0 + x * (1.0 / 24.0))))
    em1 = jnp.where(x > -0.0625, poly, jnp.exp(x) - 1.0)
    return jnp.where(x > 0, x, em1)


def _mixer_kernel(sT_ref, qsT_ref, wcat_ref, bcat_ref, v2w_ref, v2b_ref, yT_ref,
                  *, n_agents, embed_dim, n_quantiles, rest):
    A, E, Q = n_agents, embed_dim, n_quantiles

    sT = sT_ref[...]                        # (S, TB)    matmul dtype (bf16 / f32)
    qsT = qsT_ref[...]                      # (A*Q, TB)  f32

    # One fused hypernetwork matmul on the MXU (f32 accumulation):
    #   rows [0, A*E) -> w1, next E -> b1, next E -> w_final, next E -> V hidden.
    z = jnp.dot(wcat_ref[...], sT, preferred_element_type=jnp.float32)
    z = z + bcat_ref[...]                   # (A*E + 3E, TB), f32

    w1 = z[:A * E, :]                       # (A*E, TB)
    b1 = z[A * E:A * E + E, :]              # (E, TB)
    wf = z[A * E + E:A * E + 2 * E, :]      # (E, TB)
    vh = z[A * E + 2 * E:A * E + 3 * E, :]  # (E, TB)
    if not rest:
        w1 = jnp.abs(w1)
        wf = jnp.abs(wf)

    # V(s) = Linear(ReLU(Linear(s)))  ->  (1, TB)
    vh = jnp.maximum(vh, 0.0)
    v = jnp.sum(vh * v2w_ref[...], axis=0, keepdims=True) + v2b_ref[...]

    # Per-quantile fused mixing. A and Q are tiny -> fully unrolled; the (B, Q, E)
    # intermediate of the reference is never materialized and every operand keeps
    # the batch on the 128-lane axis (no lane padding anywhere).
    for q in range(Q):
        h = b1
        for a in range(A):
            h = h + qsT[a * Q + q:a * Q + q + 1, :] * w1[a * E:(a + 1) * E, :]
        h = _elu(h)
        # Lane-dense (1, TB) row store into the transposed output block.
        yT_ref[q:q + 1, :] = jnp.sum(h * wf, axis=0, keepdims=True) + v


def dresq_mixer_forward(agent_qs, states, params, target=False, rest=False, *,
                        block_b=512, mm_dtype=jnp.bfloat16):
    """Pallas TPU implementation of DresQMixer.forward (hypernet_layers == 1).

    `target` only selects which quantile count the caller fed in; the math is
    identical and Q is read from agent_qs, so it is interface-only here.
    `block_b` is the batch tile (rounded up to a multiple of 128; keep it such
    that (bs*T)/block_b >= 2 on v7x so both TensorCores get work).
    `mm_dtype=jnp.float32` restores exact PyTorch f32 matmul semantics;
    bfloat16 (default) keeps f32 accumulation but halves streamed-state traffic.
    """
    del target
    bs, T, A, Q = agent_qs.shape
    S = states.shape[-1]
    E = params["b1_w"].shape[0]            # torch nn.Linear weight layout: (out, in)
    B = bs * T

    # Batch tile: multiple of 128 (MXU / lane alignment), capped near B; pad B
    # up to a whole number of tiles instead of asserting divisibility.
    blk = _round_up(max(1, min(block_b, B)), 128)
    B_pad = _round_up(B, blk)
    grid = B_pad // blk

    st = states.reshape(B, S).astype(jnp.float32)
    qs = agent_qs.reshape(B, A * Q).astype(jnp.float32)
    if B_pad != B:
        pad = ((0, B_pad - B), (0, 0))
        st = jnp.pad(st, pad)
        qs = jnp.pad(qs, pad)
    sT = st.T.astype(mm_dtype)             # (S, B_pad)      matmul operand
    qsT = qs.T                             # (A*Q, B_pad)    f32 (VPU operand)

    # Fused hypernetwork parameters: rows = [w1 | b1 | w_final | V.0].
    wcat = jnp.concatenate(
        [params["w1_w"], params["b1_w"], params["wf_w"], params["v1_w"]],
        axis=0).astype(mm_dtype)                                    # (A*E+3E, S)
    bcat = jnp.concatenate(
        [params["w1_b"], params["b1_b"], params["wf_b"], params["v1_b"]],
        axis=0).reshape(-1, 1).astype(jnp.float32)                  # (A*E+3E, 1)
    v2w = params["v2_w"].reshape(E, 1).astype(jnp.float32)          # (E, 1)
    v2b = params["v2_b"].reshape(1, 1).astype(jnp.float32)          # (1, 1)

    kernel = functools.partial(_mixer_kernel, n_agents=A, embed_dim=E,
                               n_quantiles=Q, rest=rest)

    def rep(shape):  # full-array block, same for every grid step
        return pl.BlockSpec(shape, lambda i, _r=len(shape): (0,) * _r)

    yT = pl.pallas_call(
        kernel,
        out_shape=jax.ShapeDtypeStruct((Q, B_pad), jnp.float32),
        grid_spec=pltpu.PrefetchScalarGridSpec(
            num_scalar_prefetch=0,
            grid=(grid,),
            in_specs=[
                pl.BlockSpec((S, blk), lambda i: (0, i)),       # states^T
                pl.BlockSpec((A * Q, blk), lambda i: (0, i)),   # agent_qs^T
                rep(wcat.shape), rep(bcat.shape),
                rep(v2w.shape), rep(v2b.shape),
            ],
            out_specs=pl.BlockSpec((Q, blk), lambda i: (0, i)),  # y^T, lane-dense
        ),
        compiler_params=pltpu.CompilerParams(
            dimension_semantics=("parallel",)),
    )(sT, qsT, wcat, bcat, v2w, v2b)

    # Z_tot = y.reshape(bs, -1, 1, n_rnd_quantiles)
    return yT.T[:B].reshape(bs, T, 1, Q)


def dresq_mixer_reference(agent_qs, states, params, *, rest=False,
                          mm_dtype=jnp.float32):
    """Pure-JAX mirror of the PyTorch forward (mixing kept in plain f32 ops)."""
    bs, T, A, Q = agent_qs.shape
    S = states.shape[-1]
    E = params["b1_w"].shape[0]
    st = states.reshape(-1, S).astype(jnp.float32)
    qs = agent_qs.reshape(-1, A, Q).astype(jnp.float32)

    def lin(x, w, b):
        return jnp.dot(x.astype(mm_dtype), w.T.astype(mm_dtype),
                       preferred_element_type=jnp.float32) + b

    w1 = lin(st, params["w1_w"], params["w1_b"])        # (B, A*E)
    wf = lin(st, params["wf_w"], params["wf_b"])        # (B, E)
    if not rest:
        w1, wf = jnp.abs(w1), jnp.abs(wf)
    b1 = lin(st, params["b1_w"], params["b1_b"])        # (B, E)
    w1 = w1.reshape(-1, A, E)

    hidden = jnp.sum(qs[:, :, :, None] * w1[:, :, None, :], axis=1) + b1[:, None, :]
    hidden = jnp.where(hidden > 0, hidden, jnp.expm1(hidden))          # (B, Q, E)

    vh = jnp.maximum(lin(st, params["v1_w"], params["v1_b"]), 0.0)
    v = jnp.sum(vh * params["v2_w"], axis=-1, keepdims=True) + params["v2_b"]  # (B, 1)

    y = jnp.sum(hidden * wf[:, None, :], axis=-1) + v                  # (B, Q)
    return y.reshape(bs, T, 1, Q)


def _init_linear(kw, kb, fan_in, fan_out):
    bound = 1.0 / jnp.sqrt(jnp.float32(fan_in))
    w = jax.random.uniform(kw, (fan_out, fan_in), jnp.float32, -bound, bound)
    b = jax.random.uniform(kb, (fan_out,), jnp.float32, -bound, bound)
    return w, b


if __name__ == "__main__":
    # n_agents=4, state_dim=32, mixing_embed_dim=32, n_quantiles=8.
    A, Q, S, E = 4, 8, 32, 32

    keys = jax.random.split(jax.random.PRNGKey(0), 14)
    w1_w, w1_b = _init_linear(keys[0], keys[1], S, E * A)   # hyper_w_1
    b1_w, b1_b = _init_linear(keys[2], keys[3], S, E)       # hyper_b_1
    wf_w, wf_b = _init_linear(keys[4], keys[5], S, E)       # hyper_w_final
    v1_w, v1_b = _init_linear(keys[6], keys[7], S, E)       # V[0]
    v2_w, v2_b = _init_linear(keys[8], keys[9], E, 1)       # V[2]
    params = dict(w1_w=w1_w, w1_b=w1_b, b1_w=b1_w, b1_b=b1_b,
                  wf_w=wf_w, wf_b=wf_b, v1_w=v1_w, v1_b=v1_b,
                  v2_w=v2_w, v2_b=v2_b)

    # (bs, T, block_b): a small canonical case (single tile, padded 16 -> 128)
    # and a multi-tile case exercising grid > 1 plus batch padding (300 -> 384).
    cases = [(2, 8, 512), (3, 100, 128)]
    data_keys = jax.random.split(keys[10], 2 * len(cases))

    for idx, (bs, T, blk) in enumerate(cases):
        agent_qs = jax.random.normal(data_keys[2 * idx], (bs, T, A, Q), jnp.float32)
        states = jax.random.normal(data_keys[2 * idx + 1], (bs, T, S), jnp.float32)

        z = dresq_mixer_forward(agent_qs, states, params, target=False, rest=False,
                                block_b=blk, mm_dtype=jnp.bfloat16)
        z = jax.block_until_ready(z)
        assert z.shape == (bs, T, 1, Q), z.shape

        # Reference with the same bf16-rounded matmul inputs (f32 accumulation and
        # f32 mixing on both sides), so the comparison isolates kernel logic.
        z_ref = dresq_mixer_reference(agent_qs, states, params, rest=False,
                                      mm_dtype=jnp.bfloat16)
        if not jnp.allclose(z, z_ref, rtol=1e-3, atol=1e-3):
            err = float(jnp.max(jnp.abs(z - z_ref)))
            raise AssertionError(
                f"Pallas output mismatch for bs={bs}, T={T}: max abs err {err}")

    print("KERNEL_OK")
</pallas_src>

<mosaic_0001>
module attributes {stable_mosaic.version = 11 : i64} {
  func.func @_mixer_kernel(%arg0: i32, %arg1: memref<32x128xbf16, #tpu.memory_space<vmem>>, %arg2: memref<32x128xf32, #tpu.memory_space<vmem>>, %arg3: memref<224x32xbf16, #tpu.memory_space<vmem>>, %arg4: memref<224x1xf32, #tpu.memory_space<vmem>>, %arg5: memref<32x1xf32, #tpu.memory_space<vmem>>, %arg6: memref<1x1xf32, #tpu.memory_space<vmem>>, %arg7: memref<8x128xf32, #tpu.memory_space<vmem>>) attributes {dimension_semantics = [#tpu.dimension_semantics<parallel>], iteration_bounds = array<i64: 1>, scalar_prefetch = 0 : i64, scratch_operands = 0 : i64, tpu.core_type = #tpu.core_type<tc>, window_params = [{transform_indices = @transform_0, window_bounds = array<i64: 32, 128>}, {transform_indices = @transform_1, window_bounds = array<i64: 32, 128>}, {pipeline_mode = #tpu.pipeline_mode<synchronous>, transform_indices = @transform_2, window_bounds = array<i64: 224, 32>}, {pipeline_mode = #tpu.pipeline_mode<synchronous>, transform_indices = @transform_3, window_bounds = array<i64: 224, 1>}, {pipeline_mode = #tpu.pipeline_mode<synchronous>, transform_indices = @transform_4, window_bounds = array<i64: 32, 1>}, {pipeline_mode = #tpu.pipeline_mode<synchronous>, transform_indices = @transform_5, window_bounds = array<i64: 1, 1>}, {transform_indices = @transform_6, window_bounds = array<i64: 8, 128>}]} {
    %c0 = arith.constant 0 : index
    %c0_0 = arith.constant 0 : index
    %0 = vector.load %arg1[%c0, %c0_0] : memref<32x128xbf16, #tpu.memory_space<vmem>>, vector<32x128xbf16>
    %c0_1 = arith.constant 0 : index
    %c0_2 = arith.constant 0 : index
    %1 = vector.load %arg2[%c0_1, %c0_2] : memref<32x128xf32, #tpu.memory_space<vmem>>, vector<32x128xf32>
    %c0_3 = arith.constant 0 : index
    %c0_4 = arith.constant 0 : index
    %2 = vector.load %arg3[%c0_3, %c0_4] : memref<224x32xbf16, #tpu.memory_space<vmem>>, vector<224x32xbf16>
    %cst = arith.constant dense<0.000000e+00> : vector<224x128xf32>
    %3 = tpu.matmul %2, %0, %cst {dimension_numbers = #tpu.dot_dimension_numbers<[1], [0], [0], [1], [0, 0, 1, 1], [], []>} : vector<224x32xbf16>, vector<32x128xbf16>, vector<224x128xf32> -> vector<224x128xf32>
    %c0_5 = arith.constant 0 : index
    %c0_6 = arith.constant 0 : index
    %4 = vector.load %arg4[%c0_5, %c0_6] : memref<224x1xf32, #tpu.memory_space<vmem>>, vector<224x1xf32>
    %5 = vector.broadcast %4 : vector<224x1xf32> to vector<224x128xf32>
    %6 = arith.addf %3, %5 : vector<224x128xf32>
    %7 = vector.extract_strided_slice %6 {offsets = [0, 0], sizes = [128, 128], strides = [1, 1]} : vector<224x128xf32> to vector<128x128xf32>
    %8 = vector.extract_strided_slice %6 {offsets = [128, 0], sizes = [32, 128], strides = [1, 1]} : vector<224x128xf32> to vector<32x128xf32>
    %9 = vector.extract_strided_slice %6 {offsets = [160, 0], sizes = [32, 128], strides = [1, 1]} : vector<224x128xf32> to vector<32x128xf32>
    %10 = vector.extract_strided_slice %6 {offsets = [192, 0], sizes = [32, 128], strides = [1, 1]} : vector<224x128xf32> to vector<32x128xf32>
    %11 = math.absf %7 : vector<128x128xf32>
    %12 = math.absf %9 : vector<32x128xf32>
    %cst_7 = arith.constant 0.000000e+00 : f32
    %13 = vector.broadcast %cst_7 : f32 to vector<32x128xf32>
    %14 = arith.maximumf %10, %13 : vector<32x128xf32>
    %c0_8 = arith.constant 0 : index
    %c0_9 = arith.constant 0 : index
    %15 = vector.load %arg5[%c0_8, %c0_9] : memref<32x1xf32, #tpu.memory_space<vmem>>, vector<32x1xf32>
    %16 = vector.broadcast %15 : vector<32x1xf32> to vector<32x128xf32>
    %17 = arith.mulf %14, %16 : vector<32x128xf32>
    %cst_10 = arith.constant dense<0.000000e+00> : vector<128xf32>
    %18 = vector.multi_reduction <add>, %17, %cst_10 [0] : vector<32x128xf32> to vector<128xf32>
    %19 = vector.shape_cast %18 : vector<128xf32> to vector<1x128xf32>
    %c0_11 = arith.constant 0 : index
    %c0_12 = arith.constant 0 : index
    %20 = vector.load %arg6[%c0_11, %c0_12] : memref<1x1xf32, #tpu.memory_space<vmem>>, vector<1x1xf32>
    %21 = vector.broadcast %20 : vector<1x1xf32> to vector<1x128xf32>
    %22 = arith.addf %19, %21 : vector<1x128xf32>
    %23 = vector.extract_strided_slice %1 {offsets = [0, 0], sizes = [1, 128], strides = [1, 1]} : vector<32x128xf32> to vector<1x128xf32>
    %24 = vector.extract_strided_slice %11 {offsets = [0, 0], sizes = [32, 128], strides = [1, 1]} : vector<128x128xf32> to vector<32x128xf32>
    %25 = vector.broadcast %23 : vector<1x128xf32> to vector<32x128xf32>
    %26 = arith.mulf %25, %24 : vector<32x128xf32>
    %27 = arith.addf %8, %26 : vector<32x128xf32>
    %28 = vector.extract_strided_slice %1 {offsets = [8, 0], sizes = [1, 128], strides = [1, 1]} : vector<32x128xf32> to vector<1x128xf32>
    %29 = vector.extract_strided_slice %11 {offsets = [32, 0], sizes = [32, 128], strides = [1, 1]} : vector<128x128xf32> to vector<32x128xf32>
    %30 = vector.broadcast %28 : vector<1x128xf32> to vector<32x128xf32>
    %31 = arith.mulf %30, %29 : vector<32x128xf32>
    %32 = arith.addf %27, %31 : vector<32x128xf32>
    %33 = vector.extract_strided_slice %1 {offsets = [16, 0], sizes = [1, 128], strides = [1, 1]} : vector<32x128xf32> to vector<1x128xf32>
    %34 = vector.extract_strided_slice %11 {offsets = [64, 0], sizes = [32, 128], strides = [1, 1]} : vector<128x128xf32> to vector<32x128xf32>
    %35 = vector.broadcast %33 : vector<1x128xf32> to vector<32x128xf32>
    %36 = arith.mulf %35, %34 : vector<32x128xf32>
    %37 = arith.addf %32, %36 : vector<32x128xf32>
    %38 = vector.extract_strided_slice %1 {offsets = [24, 0], sizes = [1, 128], strides = [1, 1]} : vector<32x128xf32> to vector<1x128xf32>
    %39 = vector.extract_strided_slice %11 {offsets = [96, 0], sizes = [32, 128], strides = [1, 1]} : vector<128x128xf32> to vector<32x128xf32>
    %40 = vector.broadcast %38 : vector<1x128xf32> to vector<32x128xf32>
    %41 = arith.mulf %40, %39 : vector<32x128xf32>
    %42 = arith.addf %37, %41 : vector<32x128xf32>
    %cst_13 = arith.constant 0.0416666679 : f32
    %43 = vector.broadcast %cst_13 : f32 to vector<32x128xf32>
    %44 = arith.mulf %42, %43 : vector<32x128xf32>
    %cst_14 = arith.constant 0.166666672 : f32
    %45 = vector.broadcast %cst_14 : f32 to vector<32x128xf32>
    %46 = arith.addf %45, %44 : vector<32x128xf32>
    %47 = arith.mulf %42, %46 : vector<32x128xf32>
    %cst_15 = arith.constant 5.000000e-01 : f32
    %48 = vector.broadcast %cst_15 : f32 to vector<32x128xf32>
    %49 = arith.addf %48, %47 : vector<32x128xf32>
    %50 = arith.mulf %42, %49 : vector<32x128xf32>
    %cst_16 = arith.constant 1.000000e+00 : f32
    %51 = vector.broadcast %cst_16 : f32 to vector<32x128xf32>
    %52 = arith.addf %51, %50 : vector<32x128xf32>
    %53 = arith.mulf %42, %52 : vector<32x128xf32>
    %cst_17 = arith.constant -6.250000e-02 : f32
    %54 = vector.broadcast %cst_17 : f32 to vector<32x128xf32>
    %55 = arith.cmpf ogt, %42, %54 : vector<32x128xf32>
    %56 = math.exp %42 : vector<32x128xf32>
    %cst_18 = arith.constant 1.000000e+00 : f32
    %57 = vector.broadcast %cst_18 : f32 to vector<32x128xf32>
    %58 = arith.subf %56, %57 : vector<32x128xf32>
    %59 = arith.select %55, %53, %58 : vector<32x128xi1>, vector<32x128xf32>
    %cst_19 = arith.constant 0.000000e+00 : f32
    %60 = vector.broadcast %cst_19 : f32 to vector<32x128xf32>
    %61 = arith.cmpf ogt, %42, %60 : vector<32x128xf32>
    %62 = arith.select %61, %42, %59 : vector<32x128xi1>, vector<32x128xf32>
    %63 = arith.mulf %62, %12 : vector<32x128xf32>
    %cst_20 = arith.constant dense<0.000000e+00> : vector<128xf32>
    %64 = vector.multi_reduction <add>, %63, %cst_20 [0] : vector<32x128xf32> to vector<128xf32>
    %65 = vector.shape_cast %64 : vector<128xf32> to vector<1x128xf32>
    %66 = arith.addf %65, %22 : vector<1x128xf32>
    %c0_21 = arith.constant 0 : index
    %c0_22 = arith.constant 0 : index
    %67 = vector.load %arg7[%c0_21, %c0_22] : memref<8x128xf32, #tpu.memory_space<vmem>>, vector<1x128xf32>
    tpu.vector_store %arg7[%c0_21, %c0_22], %66 {strides = array<i32>} : memref<8x128xf32, #tpu.memory_space<vmem>>, vector<1x128xf32>,
    %68 = vector.extract_strided_slice %1 {offsets = [1, 0], sizes = [1, 128], strides = [1, 1]} : vector<32x128xf32> to vector<1x128xf32>
    %69 = vector.extract_strided_slice %11 {offsets = [0, 0], sizes = [32, 128], strides = [1, 1]} : vector<128x128xf32> to vector<32x128xf32>
    %70 = vector.broadcast %68 : vector<1x128xf32> to vector<32x128xf32>
    %71 = arith.mulf %70, %69 : vector<32x128xf32>
    %72 = arith.addf %8, %71 : vector<32x128xf32>
    %73 = vector.extract_strided_slice %1 {offsets = [9, 0], sizes = [1, 128], strides = [1, 1]} : vector<32x128xf32> to vector<1x128xf32>
    %74 = vector.extract_strided_slice %11 {offsets = [32, 0], sizes = [32, 128], strides = [1, 1]} : vector<128x128xf32> to vector<32x128xf32>
    %75 = vector.broadcast %73 : vector<1x128xf32> to vector<32x128xf32>
    %76 = arith.mulf %75, %74 : vector<32x128xf32>
    %77 = arith.addf %72, %76 : vector<32x128xf32>
    %78 = vector.extract_strided_slice %1 {offsets = [17, 0], sizes = [1, 128], strides = [1, 1]} : vector<32x128xf32> to vector<1x128xf32>
    %79 = vector.extract_strided_slice %11 {offsets = [64, 0], sizes = [32, 128], strides = [1, 1]} : vector<128x128xf32> to vector<32x128xf32>
    %80 = vector.broadcast %78 : vector<1x128xf32> to vector<32x128xf32>
    %81 = arith.mulf %80, %79 : vector<32x128xf32>
    %82 = arith.addf %77, %81 : vector<32x128xf32>
    %83 = vector.extract_strided_slice %1 {offsets = [25, 0], sizes = [1, 128], strides = [1, 1]} : vector<32x128xf32> to vector<1x128xf32>
    %84 = vector.extract_strided_slice %11 {offsets = [96, 0], sizes = [32, 128], strides = [1, 1]} : vector<128x128xf32> to vector<32x128xf32>
    %85 = vector.broadcast %83 : vector<1x128xf32> to vector<32x128xf32>
    %86 = arith.mulf %85, %84 : vector<32x128xf32>
    %87 = arith.addf %82, %86 : vector<32x128xf32>
    %cst_23 = arith.constant 0.0416666679 : f32
    %88 = vector.broadcast %cst_23 : f32 to vector<32x128xf32>
    %89 = arith.mulf %87, %88 : vector<32x128xf32>
    %cst_24 = arith.constant 0.166666672 : f32
    %90 = vector.broadcast %cst_24 : f32 to vector<32x128xf32>
    %91 = arith.addf %90, %89 : vector<32x128xf32>
    %92 = arith.mulf %87, %91 : vector<32x128xf32>
    %cst_25 = arith.constant 5.000000e-01 : f32
    %93 = vector.broadcast %cst_25 : f32 to vector<32x128xf32>
    %94 = arith.addf %93, %92 : vector<32x128xf32>
    %95 = arith.mulf %87, %94 : vector<32x128xf32>
    %cst_26 = arith.constant 1.000000e+00 : f32
    %96 = vector.broadcast %cst_26 : f32 to vector<32x128xf32>
    %97 = arith.addf %96, %95 : vector<32x128xf32>
    %98 = arith.mulf %87, %97 : vector<32x128xf32>
    %cst_27 = arith.constant -6.250000e-02 : f32
    %99 = vector.broadcast %cst_27 : f32 to vector<32x128xf32>
    %100 = arith.cmpf ogt, %87, %99 : vector<32x128xf32>
    %101 = math.exp %87 : vector<32x128xf32>
    %cst_28 = arith.constant 1.000000e+00 : f32
    %102 = vector.broadcast %cst_28 : f32 to vector<32x128xf32>
    %103 = arith.subf %101, %102 : vector<32x128xf32>
    %104 = arith.select %100, %98, %103 : vector<32x128xi1>, vector<32x128xf32>
    %cst_29 = arith.constant 0.000000e+00 : f32
    %105 = vector.broadcast %cst_29 : f32 to vector<32x128xf32>
    %106 = arith.cmpf ogt, %87, %105 : vector<32x128xf32>
    %107 = arith.select %106, %87, %104 : vector<32x128xi1>, vector<32x128xf32>
    %108 = arith.mulf %107, %12 : vector<32x128xf32>
    %cst_30 = arith.constant dense<0.000000e+00> : vector<128xf32>
    %109 = vector.multi_reduction <add>, %108, %cst_30 [0] : vector<32x128xf32> to vector<128xf32>
    %110 = vector.shape_cast %109 : vector<128xf32> to vector<1x128xf32>
    %111 = arith.addf %110, %22 : vector<1x128xf32>
    %c1 = arith.constant 1 : index
    %c0_31 = arith.constant 0 : index
    %112 = vector.load %arg7[%c1, %c0_31] : memref<8x128xf32, #tpu.memory_space<vmem>>, vector<1x128xf32>
    tpu.vector_store %arg7[%c1, %c0_31], %111 {strides = array<i32>} : memref<8x128xf32, #tpu.memory_space<vmem>>, vector<1x128xf32>,
    %113 = vector.extract_strided_slice %1 {offsets = [2, 0], sizes = [1, 128], strides = [1, 1]} : vector<32x128xf32> to vector<1x128xf32>
    %114 = vector.extract_strided_slice %11 {offsets = [0, 0], sizes = [32, 128], strides = [1, 1]} : vector<128x128xf32> to vector<32x128xf32>
    %115 = vector.broadcast %113 : vector<1x128xf32> to vector<32x128xf32>
    %116 = arith.mulf %115, %114 : vector<32x128xf32>
    %117 = arith.addf %8, %116 : vector<32x128xf32>
    %118 = vector.extract_strided_slice %1 {offsets = [10, 0], sizes = [1, 128], strides = [1, 1]} : vector<32x128xf32> to vector<1x128xf32>
    %119 = vector.extract_strided_slice %11 {offsets = [32, 0], sizes = [32, 128], strides = [1, 1]} : vector<128x128xf32> to vector<32x128xf32>
    %120 = vector.broadcast %118 : vector<1x128xf32> to vector<32x128xf32>
    %121 = arith.mulf %120, %119 : vector<32x128xf32>
    %122 = arith.addf %117, %121 : vector<32x128xf32>
    %123 = vector.extract_strided_slice %1 {offsets = [18, 0], sizes = [1, 128], strides = [1, 1]} : vector<32x128xf32> to vector<1x128xf32>
    %124 = vector.extract_strided_slice %11 {offsets = [64, 0], sizes = [32, 128], strides = [1, 1]} : vector<128x128xf32> to vector<32x128xf32>
    %125 = vector.broadcast %123 : vector<1x128xf32> to vector<32x128xf32>
    %126 = arith.mulf %125, %124 : vector<32x128xf32>
    %127 = arith.addf %122, %126 : vector<32x128xf32>
    %128 = vector.extract_strided_slice %1 {offsets = [26, 0], sizes = [1, 128], strides = [1, 1]} : vector<32x128xf32> to vector<1x128xf32>
    %129 = vector.extract_strided_slice %11 {offsets = [96, 0], sizes = [32, 128], strides = [1, 1]} : vector<128x128xf32> to vector<32x128xf32>
    %130 = vector.broadcast %128 : vector<1x128xf32> to vector<32x128xf32>
    %131 = arith.mulf %130, %129 : vector<32x128xf32>
    %132 = arith.addf %127, %131 : vector<32x128xf32>
    %cst_32 = arith.constant 0.0416666679 : f32
    %133 = vector.broadcast %cst_32 : f32 to vector<32x128xf32>
    %134 = arith.mulf %132, %133 : vector<32x128xf32>
    %cst_33 = arith.constant 0.166666672 : f32
    %135 = vector.broadcast %cst_33 : f32 to vector<32x128xf32>
    %136 = arith.addf %135, %134 : vector<32x128xf32>
    %137 = arith.mulf %132, %136 : vector<32x128xf32>
    %cst_34 = arith.constant 5.000000e-01 : f32
    %138 = vector.broadcast %cst_34 : f32 to vector<32x128xf32>
    %139 = arith.addf %138, %137 : vector<32x128xf32>
    %140 = arith.mulf %132, %139 : vector<32x128xf32>
    %cst_35 = arith.constant 1.000000e+00 : f32
    %141 = vector.broadcast %cst_35 : f32 to vector<32x128xf32>
    %142 = arith.addf %141, %140 : vector<32x128xf32>
    %143 = arith.mulf %132, %142 : vector<32x128xf32>
    %cst_36 = arith.constant -6.250000e-02 : f32
    %144 = vector.broadcast %cst_36 : f32 to vector<32x128xf32>
    %145 = arith.cmpf ogt, %132, %144 : vector<32x128xf32>
    %146 = math.exp %132 : vector<32x128xf32>
    %cst_37 = arith.constant 1.000000e+00 : f32
    %147 = vector.broadcast %cst_37 : f32 to vector<32x128xf32>
    %148 = arith.subf %146, %147 : vector<32x128xf32>
    %149 = arith.select %145, %143, %148 : vector<32x128xi1>, vector<32x128xf32>
    %cst_38 = arith.constant 0.000000e+00 : f32
    %150 = vector.broadcast %cst_38 : f32 to vector<32x128xf32>
    %151 = arith.cmpf ogt, %132, %150 : vector<32x128xf32>
    %152 = arith.select %151, %132, %149 : vector<32x128xi1>, vector<32x128xf32>
    %153 = arith.mulf %152, %12 : vector<32x128xf32>
    %cst_39 = arith.constant dense<0.000000e+00> : vector<128xf32>
    %154 = vector.multi_reduction <add>, %153, %cst_39 [0] : vector<32x128xf32> to vector<128xf32>
    %155 = vector.shape_cast %154 : vector<128xf32> to vector<1x128xf32>
    %156 = arith.addf %155, %22 : vector<1x128xf32>
    %c2 = arith.constant 2 : index
    %c0_40 = arith.constant 0 : index
    %157 = vector.load %arg7[%c2, %c0_40] : memref<8x128xf32, #tpu.memory_space<vmem>>, vector<1x128xf32>
    tpu.vector_store %arg7[%c2, %c0_40], %156 {strides = array<i32>} : memref<8x128xf32, #tpu.memory_space<vmem>>, vector<1x128xf32>,
    %158 = vector.extract_strided_slice %1 {offsets = [3, 0], sizes = [1, 128], strides = [1, 1]} : vector<32x128xf32> to vector<1x128xf32>
    %159 = vector.extract_strided_slice %11 {offsets = [0, 0], sizes = [32, 128], strides = [1, 1]} : vector<128x128xf32> to vector<32x128xf32>
    %160 = vector.broadcast %158 : vector<1x128xf32> to vector<32x128xf32>
    %161 = arith.mulf %160, %159 : vector<32x128xf32>
    %162 = arith.addf %8, %161 : vector<32x128xf32>
    %163 = vector.extract_strided_slice %1 {offsets = [11, 0], sizes = [1, 128], strides = [1, 1]} : vector<32x128xf32> to vector<1x128xf32>
    %164 = vector.extract_strided_slice %11 {offsets = [32, 0], sizes = [32, 128], strides = [1, 1]} : vector<128x128xf32> to vector<32x128xf32>
    %165 = vector.broadcast %163 : vector<1x128xf32> to vector<32x128xf32>
    %166 = arith.mulf %165, %164 : vector<32x128xf32>
    %167 = arith.addf %162, %166 : vector<32x128xf32>
    %168 = vector.extract_strided_slice %1 {offsets = [19, 0], sizes = [1, 128], strides = [1, 1]} : vector<32x128xf32> to vector<1x128xf32>
    %169 = vector.extract_strided_slice %11 {offsets = [64, 0], sizes = [32, 128], strides = [1, 1]} : vector<128x128xf32> to vector<32x128xf32>
    %170 = vector.broadcast %168 : vector<1x128xf32> to vector<32x128xf32>
    %171 = arith.mulf %170, %169 : vector<32x128xf32>
    %172 = arith.addf %167, %171 : vector<32x128xf32>
    %173 = vector.extract_strided_slice %1 {offsets = [27, 0], sizes = [1, 128], strides = [1, 1]} : vector<32x128xf32> to vector<1x128xf32>
    %174 = vector.extract_strided_slice %11 {offsets = [96, 0], sizes = [32, 128], strides = [1, 1]} : vector<128x128xf32> to vector<32x128xf32>
    %175 = vector.broadcast %173 : vector<1x128xf32> to vector<32x128xf32>
    %176 = arith.mulf %175, %174 : vector<32x128xf32>
    %177 = arith.addf %172, %176 : vector<32x128xf32>
    %cst_41 = arith.constant 0.0416666679 : f32
    %178 = vector.broadcast %cst_41 : f32 to vector<32x128xf32>
    %179 = arith.mulf %177, %178 : vector<32x128xf32>
    %cst_42 = arith.constant 0.166666672 : f32
    %180 = vector.broadcast %cst_42 : f32 to vector<32x128xf32>
    %181 = arith.addf %180, %179 : vector<32x128xf32>
    %182 = arith.mulf %177, %181 : vector<32x128xf32>
    %cst_43 = arith.constant 5.000000e-01 : f32
    %183 = vector.broadcast %cst_43 : f32 to vector<32x128xf32>
    %184 = arith.addf %183, %182 : vector<32x128xf32>
    %185 = arith.mulf %177, %184 : vector<32x128xf32>
    %cst_44 = arith.constant 1.000000e+00 : f32
    %186 = vector.broadcast %cst_44 : f32 to vector<32x128xf32>
    %187 = arith.addf %186, %185 : vector<32x128xf32>
    %188 = arith.mulf %177, %187 : vector<32x128xf32>
    %cst_45 = arith.constant -6.250000e-02 : f32
    %189 = vector.broadcast %cst_45 : f32 to vector<32x128xf32>
    %190 = arith.cmpf ogt, %177, %189 : vector<32x128xf32>
    %191 = math.exp %177 : vector<32x128xf32>
    %cst_46 = arith.constant 1.000000e+00 : f32
    %192 = vector.broadcast %cst_46 : f32 to vector<32x128xf32>
    %193 = arith.subf %191, %192 : vector<32x128xf32>
    %194 = arith.select %190, %188, %193 : vector<32x128xi1>, vector<32x128xf32>
    %cst_47 = arith.constant 0.000000e+00 : f32
    %195 = vector.broadcast %cst_47 : f32 to vector<32x128xf32>
    %196 = arith.cmpf ogt, %177, %195 : vector<32x128xf32>
    %197 = arith.select %196, %177, %194 : vector<32x128xi1>, vector<32x128xf32>
    %198 = arith.mulf %197, %12 : vector<32x128xf32>
    %cst_48 = arith.constant dense<0.000000e+00> : vector<128xf32>
    %199 = vector.multi_reduction <add>, %198, %cst_48 [0] : vector<32x128xf32> to vector<128xf32>
    %200 = vector.shape_cast %199 : vector<128xf32> to vector<1x128xf32>
    %201 = arith.addf %200, %22 : vector<1x128xf32>
    %c3 = arith.constant 3 : index
    %c0_49 = arith.constant 0 : index
    %202 = vector.load %arg7[%c3, %c0_49] : memref<8x128xf32, #tpu.memory_space<vmem>>, vector<1x128xf32>
    tpu.vector_store %arg7[%c3, %c0_49], %201 {strides = array<i32>} : memref<8x128xf32, #tpu.memory_space<vmem>>, vector<1x128xf32>,
    %203 = vector.extract_strided_slice %1 {offsets = [4, 0], sizes = [1, 128], strides = [1, 1]} : vector<32x128xf32> to vector<1x128xf32>
    %204 = vector.extract_strided_slice %11 {offsets = [0, 0], sizes = [32, 128], strides = [1, 1]} : vector<128x128xf32> to vector<32x128xf32>
    %205 = vector.broadcast %203 : vector<1x128xf32> to vector<32x128xf32>
    %206 = arith.mulf %205, %204 : vector<32x128xf32>
    %207 = arith.addf %8, %206 : vector<32x128xf32>
    %208 = vector.extract_strided_slice %1 {offsets = [12, 0], sizes = [1, 128], strides = [1, 1]} : vector<32x128xf32> to vector<1x128xf32>
    %209 = vector.extract_strided_slice %11 {offsets = [32, 0], sizes = [32, 128], strides = [1, 1]} : vector<128x128xf32> to vector<32x128xf32>
    %210 = vector.broadcast %208 : vector<1x128xf32> to vector<32x128xf32>
    %211 = arith.mulf %210, %209 : vector<32x128xf32>
    %212 = arith.addf %207, %211 : vector<32x128xf32>
    %213 = vector.extract_strided_slice %1 {offsets = [20, 0], sizes = [1, 128], strides = [1, 1]} : vector<32x128xf32> to vector<1x128xf32>
    %214 = vector.extract_strided_slice %11 {offsets = [64, 0], sizes = [32, 128], strides = [1, 1]} : vector<128x128xf32> to vector<32x128xf32>
    %215 = vector.broadcast %213 : vector<1x128xf32> to vector<32x128xf32>
    %216 = arith.mulf %215, %214 : vector<32x128xf32>
    %217 = arith.addf %212, %216 : vector<32x128xf32>
    %218 = vector.extract_strided_slice %1 {offsets = [28, 0], sizes = [1, 128], strides = [1, 1]} : vector<32x128xf32> to vector<1x128xf32>
    %219 = vector.extract_strided_slice %11 {offsets = [96, 0], sizes = [32, 128], strides = [1, 1]} : vector<128x128xf32> to vector<32x128xf32>
    %220 = vector.broadcast %218 : vector<1x128xf32> to vector<32x128xf32>
    %221 = arith.mulf %220, %219 : vector<32x128xf32>
    %222 = arith.addf %217, %221 : vector<32x128xf32>
    %cst_50 = arith.constant 0.0416666679 : f32
    %223 = vector.broadcast %cst_50 : f32 to vector<32x128xf32>
    %224 = arith.mulf %222, %223 : vector<32x128xf32>
    %cst_51 = arith.constant 0.166666672 : f32
    %225 = vector.broadcast %cst_51 : f32 to vector<32x128xf32>
    %226 = arith.addf %225, %224 : vector<32x128xf32>
    %227 = arith.mulf %222, %226 : vector<32x128xf32>
    %cst_52 = arith.constant 5.000000e-01 : f32
    %228 = vector.broadcast %cst_52 : f32 to vector<32x128xf32>
    %229 = arith.addf %228, %227 : vector<32x128xf32>
    %230 = arith.mulf %222, %229 : vector<32x128xf32>
    %cst_53 = arith.constant 1.000000e+00 : f32
    %231 = vector.broadcast %cst_53 : f32 to vector<32x128xf32>
    %232 = arith.addf %231, %230 : vector<32x128xf32>
    %233 = arith.mulf %222, %232 : vector<32x128xf32>
    %cst_54 = arith.constant -6.250000e-02 : f32
    %234 = vector.broadcast %cst_54 : f32 to vector<32x128xf32>
    %235 = arith.cmpf ogt, %222, %234 : vector<32x128xf32>
    %236 = math.exp %222 : vector<32x128xf32>
    %cst_55 = arith.constant 1.000000e+00 : f32
    %237 = vector.broadcast %cst_55 : f32 to vector<32x128xf32>
    %238 = arith.subf %236, %237 : vector<32x128xf32>
    %239 = arith.select %235, %233, %238 : vector<32x128xi1>, vector<32x128xf32>
    %cst_56 = arith.constant 0.000000e+00 : f32
    %240 = vector.broadcast %cst_56 : f32 to vector<32x128xf32>
    %241 = arith.cmpf ogt, %222, %240 : vector<32x128xf32>
    %242 = arith.select %241, %222, %239 : vector<32x128xi1>, vector<32x128xf32>
    %243 = arith.mulf %242, %12 : vector<32x128xf32>
    %cst_57 = arith.constant dense<0.000000e+00> : vector<128xf32>
    %244 = vector.multi_reduction <add>, %243, %cst_57 [0] : vector<32x128xf32> to vector<128xf32>
    %245 = vector.shape_cast %244 : vector<128xf32> to vector<1x128xf32>
    %246 = arith.addf %245, %22 : vector<1x128xf32>
    %c4 = arith.constant 4 : index
    %c0_58 = arith.constant 0 : index
    %247 = vector.load %arg7[%c4, %c0_58] : memref<8x128xf32, #tpu.memory_space<vmem>>, vector<1x128xf32>
    tpu.vector_store %arg7[%c4, %c0_58], %246 {strides = array<i32>} : memref<8x128xf32, #tpu.memory_space<vmem>>, vector<1x128xf32>,
    %248 = vector.extract_strided_slice %1 {offsets = [5, 0], sizes = [1, 128], strides = [1, 1]} : vector<32x128xf32> to vector<1x128xf32>
    %249 = vector.extract_strided_slice %11 {offsets = [0, 0], sizes = [32, 128], strides = [1, 1]} : vector<128x128xf32> to vector<32x128xf32>
    %250 = vector.broadcast %248 : vector<1x128xf32> to vector<32x128xf32>
    %251 = arith.mulf %250, %249 : vector<32x128xf32>
    %252 = arith.addf %8, %251 : vector<32x128xf32>
    %253 = vector.extract_strided_slice %1 {offsets = [13, 0], sizes = [1, 128], strides = [1, 1]} : vector<32x128xf32> to vector<1x128xf32>
    %254 = vector.extract_strided_slice %11 {offsets = [32, 0], sizes = [32, 128], strides = [1, 1]} : vector<128x128xf32> to vector<32x128xf32>
    %255 = vector.broadcast %253 : vector<1x128xf32> to vector<32x128xf32>
    %256 = arith.mulf %255, %254 : vector<32x128xf32>
    %257 = arith.addf %252, %256 : vector<32x128xf32>
    %258 = vector.extract_strided_slice %1 {offsets = [21, 0], sizes = [1, 128], strides = [1, 1]} : vector<32x128xf32> to vector<1x128xf32>
    %259 = vector.extract_strided_slice %11 {offsets = [64, 0], sizes = [32, 128], strides = [1, 1]} : vector<128x128xf32> to vector<32x128xf32>
    %260 = vector.broadcast %258 : vector<1x128xf32> to vector<32x128xf32>
    %261 = arith.mulf %260, %259 : vector<32x128xf32>
    %262 = arith.addf %257, %261 : vector<32x128xf32>
    %263 = vector.extract_strided_slice %1 {offsets = [29, 0], sizes = [1, 128], strides = [1, 1]} : vector<32x128xf32> to vector<1x128xf32>
    %264 = vector.extract_strided_slice %11 {offsets = [96, 0], sizes = [32, 128], strides = [1, 1]} : vector<128x128xf32> to vector<32x128xf32>
    %265 = vector.broadcast %263 : vector<1x128xf32> to vector<32x128xf32>
    %266 = arith.mulf %265, %264 : vector<32x128xf32>
    %267 = arith.addf %262, %266 : vector<32x128xf32>
    %cst_59 = arith.constant 0.0416666679 : f32
    %268 = vector.broadcast %cst_59 : f32 to vector<32x128xf32>
    %269 = arith.mulf %267, %268 : vector<32x128xf32>
    %cst_60 = arith.constant 0.166666672 : f32
    %270 = vector.broadcast %cst_60 : f32 to vector<32x128xf32>
    %271 = arith.addf %270, %269 : vector<32x128xf32>
    %272 = arith.mulf %267, %271 : vector<32x128xf32>
    %cst_61 = arith.constant 5.000000e-01 : f32
    %273 = vector.broadcast %cst_61 : f32 to vector<32x128xf32>
    %274 = arith.addf %273, %272 : vector<32x128xf32>
    %275 = arith.mulf %267, %274 : vector<32x128xf32>
    %cst_62 = arith.constant 1.000000e+00 : f32
    %276 = vector.broadcast %cst_62 : f32 to vector<32x128xf32>
    %277 = arith.addf %276, %275 : vector<32x128xf32>
    %278 = arith.mulf %267, %277 : vector<32x128xf32>
    %cst_63 = arith.constant -6.250000e-02 : f32
    %279 = vector.broadcast %cst_63 : f32 to vector<32x128xf32>
    %280 = arith.cmpf ogt, %267, %279 : vector<32x128xf32>
    %281 = math.exp %267 : vector<32x128xf32>
    %cst_64 = arith.constant 1.000000e+00 : f32
    %282 = vector.broadcast %cst_64 : f32 to vector<32x128xf32>
    %283 = arith.subf %281, %282 : vector<32x128xf32>
    %284 = arith.select %280, %278, %283 : vector<32x128xi1>, vector<32x128xf32>
    %cst_65 = arith.constant 0.000000e+00 : f32
    %285 = vector.broadcast %cst_65 : f32 to vector<32x128xf32>
    %286 = arith.cmpf ogt, %267, %285 : vector<32x128xf32>
    %287 = arith.select %286, %267, %284 : vector<32x128xi1>, vector<32x128xf32>
    %288 = arith.mulf %287, %12 : vector<32x128xf32>
    %cst_66 = arith.constant dense<0.000000e+00> : vector<128xf32>
    %289 = vector.multi_reduction <add>, %288, %cst_66 [0] : vector<32x128xf32> to vector<128xf32>
    %290 = vector.shape_cast %289 : vector<128xf32> to vector<1x128xf32>
    %291 = arith.addf %290, %22 : vector<1x128xf32>
    %c5 = arith.constant 5 : index
    %c0_67 = arith.constant 0 : index
    %292 = vector.load %arg7[%c5, %c0_67] : memref<8x128xf32, #tpu.memory_space<vmem>>, vector<1x128xf32>
    tpu.vector_store %arg7[%c5, %c0_67], %291 {strides = array<i32>} : memref<8x128xf32, #tpu.memory_space<vmem>>, vector<1x128xf32>,
    %293 = vector.extract_strided_slice %1 {offsets = [6, 0], sizes = [1, 128], strides = [1, 1]} : vector<32x128xf32> to vector<1x128xf32>
    %294 = vector.extract_strided_slice %11 {offsets = [0, 0], sizes = [32, 128], strides = [1, 1]} : vector<128x128xf32> to vector<32x128xf32>
    %295 = vector.broadcast %293 : vector<1x128xf32> to vector<32x128xf32>
    %296 = arith.mulf %295, %294 : vector<32x128xf32>
    %297 = arith.addf %8, %296 : vector<32x128xf32>
    %298 = vector.extract_strided_slice %1 {offsets = [14, 0], sizes = [1, 128], strides = [1, 1]} : vector<32x128xf32> to vector<1x128xf32>
    %299 = vector.extract_strided_slice %11 {offsets = [32, 0], sizes = [32, 128], strides = [1, 1]} : vector<128x128xf32> to vector<32x128xf32>
    %300 = vector.broadcast %298 : vector<1x128xf32> to vector<32x128xf32>
    %301 = arith.mulf %300, %299 : vector<32x128xf32>
    %302 = arith.addf %297, %301 : vector<32x128xf32>
    %303 = vector.extract_strided_slice %1 {offsets = [22, 0], sizes = [1, 128], strides = [1, 1]} : vector<32x128xf32> to vector<1x128xf32>
    %304 = vector.extract_strided_slice %11 {offsets = [64, 0], sizes = [32, 128], strides = [1, 1]} : vector<128x128xf32> to vector<32x128xf32>
    %305 = vector.broadcast %303 : vector<1x128xf32> to vector<32x128xf32>
    %306 = arith.mulf %305, %304 : vector<32x128xf32>
    %307 = arith.addf %302, %306 : vector<32x128xf32>
    %308 = vector.extract_strided_slice %1 {offsets = [30, 0], sizes = [1, 128], strides = [1, 1]} : vector<32x128xf32> to vector<1x128xf32>
    %309 = vector.extract_strided_slice %11 {offsets = [96, 0], sizes = [32, 128], strides = [1, 1]} : vector<128x128xf32> to vector<32x128xf32>
    %310 = vector.broadcast %308 : vector<1x128xf32> to vector<32x128xf32>
    %311 = arith.mulf %310, %309 : vector<32x128xf32>
    %312 = arith.addf %307, %311 : vector<32x128xf32>
    %cst_68 = arith.constant 0.0416666679 : f32
    %313 = vector.broadcast %cst_68 : f32 to vector<32x128xf32>
    %314 = arith.mulf %312, %313 : vector<32x128xf32>
    %cst_69 = arith.constant 0.166666672 : f32
    %315 = vector.broadcast %cst_69 : f32 to vector<32x128xf32>
    %316 = arith.addf %315, %314 : vector<32x128xf32>
    %317 = arith.mulf %312, %316 : vector<32x128xf32>
    %cst_70 = arith.constant 5.000000e-01 : f32
    %318 = vector.broadcast %cst_70 : f32 to vector<32x128xf32>
    %319 = arith.addf %318, %317 : vector<32x128xf32>
    %320 = arith.mulf %312, %319 : vector<32x128xf32>
    %cst_71 = arith.constant 1.000000e+00 : f32
    %321 = vector.broadcast %cst_71 : f32 to vector<32x128xf32>
    %322 = arith.addf %321, %320 : vector<32x128xf32>
    %323 = arith.mulf %312, %322 : vector<32x128xf32>
    %cst_72 = arith.constant -6.250000e-02 : f32
    %324 = vector.broadcast %cst_72 : f32 to vector<32x128xf32>
    %325 = arith.cmpf ogt, %312, %324 : vector<32x128xf32>
    %326 = math.exp %312 : vector<32x128xf32>
    %cst_73 = arith.constant 1.000000e+00 : f32
    %327 = vector.broadcast %cst_73 : f32 to vector<32x128xf32>
    %328 = arith.subf %326, %327 : vector<32x128xf32>
    %329 = arith.select %325, %323, %328 : vector<32x128xi1>, vector<32x128xf32>
    %cst_74 = arith.constant 0.000000e+00 : f32
    %330 = vector.broadcast %cst_74 : f32 to vector<32x128xf32>
    %331 = arith.cmpf ogt, %312, %330 : vector<32x128xf32>
    %332 = arith.select %331, %312, %329 : vector<32x128xi1>, vector<32x128xf32>
    %333 = arith.mulf %332, %12 : vector<32x128xf32>
    %cst_75 = arith.constant dense<0.000000e+00> : vector<128xf32>
    %334 = vector.multi_reduction <add>, %333, %cst_75 [0] : vector<32x128xf32> to vector<128xf32>
    %335 = vector.shape_cast %334 : vector<128xf32> to vector<1x128xf32>
    %336 = arith.addf %335, %22 : vector<1x128xf32>
    %c6 = arith.constant 6 : index
    %c0_76 = arith.constant 0 : index
    %337 = vector.load %arg7[%c6, %c0_76] : memref<8x128xf32, #tpu.memory_space<vmem>>, vector<1x128xf32>
    tpu.vector_store %arg7[%c6, %c0_76], %336 {strides = array<i32>} : memref<8x128xf32, #tpu.memory_space<vmem>>, vector<1x128xf32>,
    %338 = vector.extract_strided_slice %1 {offsets = [7, 0], sizes = [1, 128], strides = [1, 1]} : vector<32x128xf32> to vector<1x128xf32>
    %339 = vector.extract_strided_slice %11 {offsets = [0, 0], sizes = [32, 128], strides = [1, 1]} : vector<128x128xf32> to vector<32x128xf32>
    %340 = vector.broadcast %338 : vector<1x128xf32> to vector<32x128xf32>
    %341 = arith.mulf %340, %339 : vector<32x128xf32>
    %342 = arith.addf %8, %341 : vector<32x128xf32>
    %343 = vector.extract_strided_slice %1 {offsets = [15, 0], sizes = [1, 128], strides = [1, 1]} : vector<32x128xf32> to vector<1x128xf32>
    %344 = vector.extract_strided_slice %11 {offsets = [32, 0], sizes = [32, 128], strides = [1, 1]} : vector<128x128xf32> to vector<32x128xf32>
    %345 = vector.broadcast %343 : vector<1x128xf32> to vector<32x128xf32>
    %346 = arith.mulf %345, %344 : vector<32x128xf32>
    %347 = arith.addf %342, %346 : vector<32x128xf32>
    %348 = vector.extract_strided_slice %1 {offsets = [23, 0], sizes = [1, 128], strides = [1, 1]} : vector<32x128xf32> to vector<1x128xf32>
    %349 = vector.extract_strided_slice %11 {offsets = [64, 0], sizes = [32, 128], strides = [1, 1]} : vector<128x128xf32> to vector<32x128xf32>
    %350 = vector.broadcast %348 : vector<1x128xf32> to vector<32x128xf32>
    %351 = arith.mulf %350, %349 : vector<32x128xf32>
    %352 = arith.addf %347, %351 : vector<32x128xf32>
    %353 = vector.extract_strided_slice %1 {offsets = [31, 0], sizes = [1, 128], strides = [1, 1]} : vector<32x128xf32> to vector<1x128xf32>
    %354 = vector.extract_strided_slice %11 {offsets = [96, 0], sizes = [32, 128], strides = [1, 1]} : vector<128x128xf32> to vector<32x128xf32>
    %355 = vector.broadcast %353 : vector<1x128xf32> to vector<32x128xf32>
    %356 = arith.mulf %355, %354 : vector<32x128xf32>
    %357 = arith.addf %352, %356 : vector<32x128xf32>
    %cst_77 = arith.constant 0.0416666679 : f32
    %358 = vector.broadcast %cst_77 : f32 to vector<32x128xf32>
    %359 = arith.mulf %357, %358 : vector<32x128xf32>
    %cst_78 = arith.constant 0.166666672 : f32
    %360 = vector.broadcast %cst_78 : f32 to vector<32x128xf32>
    %361 = arith.addf %360, %359 : vector<32x128xf32>
    %362 = arith.mulf %357, %361 : vector<32x128xf32>
    %cst_79 = arith.constant 5.000000e-01 : f32
    %363 = vector.broadcast %cst_79 : f32 to vector<32x128xf32>
    %364 = arith.addf %363, %362 : vector<32x128xf32>
    %365 = arith.mulf %357, %364 : vector<32x128xf32>
    %cst_80 = arith.constant 1.000000e+00 : f32
    %366 = vector.broadcast %cst_80 : f32 to vector<32x128xf32>
    %367 = arith.addf %366, %365 : vector<32x128xf32>
    %368 = arith.mulf %357, %367 : vector<32x128xf32>
    %cst_81 = arith.constant -6.250000e-02 : f32
    %369 = vector.broadcast %cst_81 : f32 to vector<32x128xf32>
    %370 = arith.cmpf ogt, %357, %369 : vector<32x128xf32>
    %371 = math.exp %357 : vector<32x128xf32>
    %cst_82 = arith.constant 1.000000e+00 : f32
    %372 = vector.broadcast %cst_82 : f32 to vector<32x128xf32>
    %373 = arith.subf %371, %372 : vector<32x128xf32>
    %374 = arith.select %370, %368, %373 : vector<32x128xi1>, vector<32x128xf32>
    %cst_83 = arith.constant 0.000000e+00 : f32
    %375 = vector.broadcast %cst_83 : f32 to vector<32x128xf32>
    %376 = arith.cmpf ogt, %357, %375 : vector<32x128xf32>
    %377 = arith.select %376, %357, %374 : vector<32x128xi1>, vector<32x128xf32>
    %378 = arith.mulf %377, %12 : vector<32x128xf32>
    %cst_84 = arith.constant dense<0.000000e+00> : vector<128xf32>
    %379 = vector.multi_reduction <add>, %378, %cst_84 [0] : vector<32x128xf32> to vector<128xf32>
    %380 = vector.shape_cast %379 : vector<128xf32> to vector<1x128xf32>
    %381 = arith.addf %380, %22 : vector<1x128xf32>
    %c7 = arith.constant 7 : index
    %c0_85 = arith.constant 0 : index
    %382 = vector.load %arg7[%c7, %c0_85] : memref<8x128xf32, #tpu.memory_space<vmem>>, vector<1x128xf32>
    tpu.vector_store %arg7[%c7, %c0_85], %381 {strides = array<i32>} : memref<8x128xf32, #tpu.memory_space<vmem>>, vector<1x128xf32>,
    return
  }
  func.func @transform_0(%arg0: i32) -> (i32, i32) {
    %c0_i32 = arith.constant 0 : i32
    %c0_i32_0 = arith.constant 0 : i32
    return %c0_i32, %arg0 : i32, i32
  }
  func.func @transform_1(%arg0: i32) -> (i32, i32) {
    %c0_i32 = arith.constant 0 : i32
    %c0_i32_0 = arith.constant 0 : i32
    return %c0_i32, %arg0 : i32, i32
  }
  func.func @transform_2(%arg0: i32) -> (i32, i32) {
    %c0_i32 = arith.constant 0 : i32
    %c0_i32_0 = arith.constant 0 : i32
    %c0_i32_1 = arith.constant 0 : i32
    return %c0_i32, %c0_i32_0 : i32, i32
  }
  func.func @transform_3(%arg0: i32) -> (i32, i32) {
    %c0_i32 = arith.constant 0 : i32
    %c0_i32_0 = arith.constant 0 : i32
    %c0_i32_1 = arith.constant 0 : i32
    return %c0_i32, %c0_i32_0 : i32, i32
  }
  func.func @transform_4(%arg0: i32) -> (i32, i32) {
    %c0_i32 = arith.constant 0 : i32
    %c0_i32_0 = arith.constant 0 : i32
    %c0_i32_1 = arith.constant 0 : i32
    return %c0_i32, %c0_i32_0 : i32, i32
  }
  func.func @transform_5(%arg0: i32) -> (i32, i32) {
    %c0_i32 = arith.constant 0 : i32
    %c0_i32_0 = arith.constant 0 : i32
    %c0_i32_1 = arith.constant 0 : i32
    return %c0_i32, %c0_i32_0 : i32, i32
  }
  func.func @transform_6(%arg0: i32) -> (i32, i32) {
    %c0_i32 = arith.constant 0 : i32
    %c0_i32_0 = arith.constant 0 : i32
    return %c0_i32, %arg0 : i32, i32
  }
}

</mosaic_0001>

<llo_original>
// kernel: tpu_custom_call.1
$region0: #{tpu_custom_call.1}
  #allocation0 [shape = 'u32[]', space=smem, size = 0x4, offset = 0x4, fixed_abs, tag = 'smem constant byte address 0x4 - core index']
  #allocation1 [shape = 'u32[72,128]{1,0:T(1,128)}', space=vmem, size = 0x9000, scoped, tag = 'internal scratch']
  #allocation2 [shape = 'f32[1,1]{1,0:T(1,128)S(1)}', space=vmem, size = 0x200, scoped, tag = 'scoped memory for tpu_custom_call.1']
  %s0 = inlined_call_operand.vmem [shape: bf16[32,128], index: 0, kind: input, shape index: {}]
  %s1 = inlined_call_operand.vmem [shape: f32[32,128], index: 1, kind: input, shape index: {}]
  %s2 = inlined_call_operand.vmem [shape: bf16[224,32], index: 2, kind: input, shape index: {}]
  %s3 = inlined_call_operand.vmem [shape: f32[224,1], index: 3, kind: input, shape index: {}]
  %s4 = inlined_call_operand.vmem [shape: f32[32,1], index: 4, kind: input, shape index: {}]
  %s5 = inlined_call_operand.<no memory space> [shape: f32[1,1], index: 5, kind: input, shape index: {}]
  %s6 = inlined_call_operand.hbm [shape: f32[8,128], index: 6, kind: output, shape index: {}]
  %s7 = sld [smem:[#allocation0]]
  $region34: #{tpu_custom_call.1} parent=0
    _
  %s9 = ssub.s32 1, %s7
  %s10 = scalar_select 0, %s9, %s7
  %v11 = vstv %s5
  %12 = vst [vmem:[#allocation2] sm:$0x1] %v11
  $region1: #{tpu_custom_call.1} parent=0
    #allocation3 [shape = 'u8[4096]{0}', space=vmem, size = 0x1000, scoped, tag = 'output window, operand 0, single buffered']
    #allocation4 [shape = 's32[1]{0}', space=sflag, size = 0x4, scoped, tag = 'scoped memory for tpu_custom_call.1']
    %13 = vsyncpa [#allocation4], 0
    // Predicated region
    $region2: #{tpu_custom_call.1} parent=1 // pred_check
      _
    $region3: #{tpu_custom_call.1} parent=1 // pred_check_branch
      %15 = sbr.rel (0) target = $region5
    $region4: #{tpu_custom_call.1} parent=1 // pred_region
      _
    $region5: #{tpu_custom_call.1} parent=1 // pred_fallthru
      _
    // Predicated region
    $region6: #{tpu_custom_call.1} parent=1 // pred_check
      _
    $region7: #{tpu_custom_call.1} parent=1 // pred_check_branch
      %17 = sbr.rel (0) target = $region9
    $region8: #{tpu_custom_call.1} parent=1 // pred_region
      _
    $region9: #{tpu_custom_call.1} parent=1 // pred_fallthru
      _
    // Predicated region
    $region10: #{tpu_custom_call.1} parent=1 // pred_check
      _
    $region11: #{tpu_custom_call.1} parent=1 // pred_check_branch
      %19 = sbr.rel (0) target = $region13
    $region12: #{tpu_custom_call.1} parent=1 // pred_region
      _
    $region13: #{tpu_custom_call.1} parent=1 // pred_fallthru
      _
    // Predicated region
    $region14: #{tpu_custom_call.1} parent=1 // pred_check
      _
    $region15: #{tpu_custom_call.1} parent=1 // pred_check_branch
      %21 = sbr.rel (0) target = $region17
    $region16: #{tpu_custom_call.1} parent=1 // pred_region
      _
    $region17: #{tpu_custom_call.1} parent=1 // pred_fallthru
      _
    // Predicated region
    $region18: #{tpu_custom_call.1} parent=1 // pred_check
      _
    $region19: #{tpu_custom_call.1} parent=1 // pred_check_branch
      %23 = sbr.rel (0) target = $region21
    $region20: #{tpu_custom_call.1} parent=1 // pred_region
      _
    $region21: #{tpu_custom_call.1} parent=1 // pred_fallthru
      _
    // Predicated region
    $region22: #{tpu_custom_call.1} parent=1 // pred_check
      _
    $region23: #{tpu_custom_call.1} parent=1 // pred_check_branch
      %25 = sbr.rel (0) target = $region25
    $region24: #{tpu_custom_call.1} parent=1 // pred_region
      _
    $region25: #{tpu_custom_call.1} parent=1 // pred_fallthru
      _
    %v27 = vld [vmem:[%s0] sm:$0xf]
    %v28 = vld [vmem:[%s0 + $0x4] sm:$0xf]
    %v29 = vld [vmem:[%s0 + $0x8] sm:$0xf]
    %v30 = vld [vmem:[%s0 + $0xc] sm:$0xf]
    %v31 = vld [vmem:[%s1] sm:$0xff]
    %v32 = vld [vmem:[%s1 + $0x8] sm:$0xff]
    %v33 = vld [vmem:[%s1 + $0x10] sm:$0xff]
    %v34 = vld [vmem:[%s1 + $0x18] sm:$0xff]
    %v35 = vld [vmem:[%s2] sm:$0xf]
    %v36 = vld [vmem:[%s2 + $0x4] sm:$0xf]
    %v37 = vld [vmem:[%s2 + $0x8] sm:$0xf]
    %v38 = vld [vmem:[%s2 + $0xc] sm:$0xf]
    %v39 = vld [vmem:[%s2 + $0x10] sm:$0xf]
    %v40 = vld [vmem:[%s2 + $0x14] sm:$0xf]
    %v41 = vld [vmem:[%s2 + $0x18] sm:$0xf]
    %v42 = vld [vmem:[%s2 + $0x1c] sm:$0xf]
    %v43 = vld [vmem:[%s2 + $0x20] sm:$0xf]
    %v44 = vld [vmem:[%s2 + $0x24] sm:$0xf]
    %v45 = vld [vmem:[%s2 + $0x28] sm:$0xf]
    %v46 = vld [vmem:[%s2 + $0x2c] sm:$0xf]
    %v47 = vld [vmem:[%s2 + $0x30] sm:$0xf]
    %v48 = vld [vmem:[%s2 + $0x34] sm:$0xf]
    %v49 = vld [vmem:[%s2 + $0x38] sm:$0xf]
    %v50 = vld [vmem:[%s2 + $0x3c] sm:$0xf]
    %v51 = vld [vmem:[%s2 + $0x40] sm:$0xf]
    %v52 = vld [vmem:[%s2 + $0x44] sm:$0xf]
    %v53 = vld [vmem:[%s2 + $0x48] sm:$0xf]
    %v54 = vld [vmem:[%s2 + $0x4c] sm:$0xf]
    %v55 = vld [vmem:[%s2 + $0x50] sm:$0xf]
    %v56 = vld [vmem:[%s2 + $0x54] sm:$0xf]
    %v57 = vld [vmem:[%s2 + $0x58] sm:$0xf]
    %v58 = vld [vmem:[%s2 + $0x5c] sm:$0xf]
    %v59 = vld [vmem:[%s2 + $0x60] sm:$0xf]
    %v60 = vld [vmem:[%s2 + $0x64] sm:$0xf]
    %v61 = vld [vmem:[%s2 + $0x68] sm:$0xf]
    %v62 = vld [vmem:[%s2 + $0x6c] sm:$0xf]
    %v63 = vld [vmem:[%s3] sm:$0xff]
    %v64 = vld [vmem:[%s3 + $0x8] sm:$0xff]
    %v65 = vld [vmem:[%s3 + $0x10] sm:$0xff]
    %v66 = vld [vmem:[%s3 + $0x18] sm:$0xff]
    %v67 = vld [vmem:[%s3 + $0x20] sm:$0xff]
    %v68 = vld [vmem:[%s3 + $0x28] sm:$0xff]
    %v69 = vld [vmem:[%s3 + $0x30] sm:$0xff]
    %v70 = vld [vmem:[%s3 + $0x38] sm:$0xff]
    %v71 = vld [vmem:[%s3 + $0x40] sm:$0xff]
    %v72 = vld [vmem:[%s3 + $0x48] sm:$0xff]
    %v73 = vld [vmem:[%s3 + $0x50] sm:$0xff]
    %v74 = vld [vmem:[%s3 + $0x58] sm:$0xff]
    %v75 = vld [vmem:[%s3 + $0x60] sm:$0xff]
    %v76 = vld [vmem:[%s3 + $0x68] sm:$0xff]
    %v77 = vld [vmem:[%s3 + $0x70] sm:$0xff]
    %v78 = vld [vmem:[%s3 + $0x78] sm:$0xff]
    %v79 = vld [vmem:[%s3 + $0x80] sm:$0xff]
    %v80 = vld [vmem:[%s3 + $0x88] sm:$0xff]
    %v81 = vld [vmem:[%s3 + $0x90] sm:$0xff]
    %v82 = vld [vmem:[%s3 + $0x98] sm:$0xff]
    %v83 = vld [vmem:[%s3 + $0xa0] sm:$0xff]
    %v84 = vld [vmem:[%s3 + $0xa8] sm:$0xff]
    %v85 = vld [vmem:[%s3 + $0xb0] sm:$0xff]
    %v86 = vld [vmem:[%s3 + $0xb8] sm:$0xff]
    %v87 = vld [vmem:[%s3 + $0xc0] sm:$0xff]
    %v88 = vld [vmem:[%s3 + $0xc8] sm:$0xff]
    %v89 = vld [vmem:[%s3 + $0xd0] sm:$0xff]
    %v90 = vld [vmem:[%s3 + $0xd8] sm:$0xff]
    %92 = vset.pattern.permute.xlu0 0
    %93 = vperm.xlu0 %92, %v63
    %v94 = vpop.permute.xlu0 %93
    %97 = vset.pattern.permute.xlu0 0
    %98 = vperm.xlu0 %97, %v64
    %v99 = vpop.permute.xlu0 %98
    %102 = vset.pattern.permute.xlu0 0
    %103 = vperm.xlu0 %102, %v65
    %v104 = vpop.permute.xlu0 %103
    %107 = vset.pattern.permute.xlu0 0
    %108 = vperm.xlu0 %107, %v66
    %v109 = vpop.permute.xlu0 %108
    %112 = vset.pattern.permute.xlu0 0
    %113 = vperm.xlu0 %112, %v67
    %v114 = vpop.permute.xlu0 %113
    %117 = vset.pattern.permute.xlu0 0
    %118 = vperm.xlu0 %117, %v68
    %v119 = vpop.permute.xlu0 %118
    %122 = vset.pattern.permute.xlu0 0
    %123 = vperm.xlu0 %122, %v69
    %v124 = vpop.permute.xlu0 %123
    %127 = vset.pattern.permute.xlu0 0
    %128 = vperm.xlu0 %127, %v70
    %v129 = vpop.permute.xlu0 %128
    %132 = vset.pattern.permute.xlu0 0
    %133 = vperm.xlu0 %132, %v71
    %v134 = vpop.permute.xlu0 %133
    %137 = vset.pattern.permute.xlu0 0
    %138 = vperm.xlu0 %137, %v72
    %v139 = vpop.permute.xlu0 %138
    %142 = vset.pattern.permute.xlu0 0
    %143 = vperm.xlu0 %142, %v73
    %v144 = vpop.permute.xlu0 %143
    %147 = vset.pattern.permute.xlu0 0
    %148 = vperm.xlu0 %147, %v74
    %v149 = vpop.permute.xlu0 %148
    %152 = vset.pattern.permute.xlu0 0
    %153 = vperm.xlu0 %152, %v75
    %v154 = vpop.permute.xlu0 %153
    %157 = vset.pattern.permute.xlu0 0
    %158 = vperm.xlu0 %157, %v76
    %v159 = vpop.permute.xlu0 %158
    %162 = vset.pattern.permute.xlu0 0
    %163 = vperm.xlu0 %162, %v77
    %v164 = vpop.permute.xlu0 %163
    %167 = vset.pattern.permute.xlu0 0
    %168 = vperm.xlu0 %167, %v78
    %v169 = vpop.permute.xlu0 %168
    %172 = vset.pattern.permute.xlu0 0
    %173 = vperm.xlu0 %172, %v79
    %v174 = vpop.permute.xlu0 %173
    %177 = vset.pattern.permute.xlu0 0
    %178 = vperm.xlu0 %177, %v80
    %v179 = vpop.permute.xlu0 %178
    %182 = vset.pattern.permute.xlu0 0
    %183 = vperm.xlu0 %182, %v81
    %v184 = vpop.permute.xlu0 %183
    %187 = vset.pattern.permute.xlu0 0
    %188 = vperm.xlu0 %187, %v82
    %v189 = vpop.permute.xlu0 %188
    %192 = vset.pattern.permute.xlu0 0
    %193 = vperm.xlu0 %192, %v83
    %v194 = vpop.permute.xlu0 %193
    %197 = vset.pattern.permute.xlu0 0
    %198 = vperm.xlu0 %197, %v84
    %v199 = vpop.permute.xlu0 %198
    %202 = vset.pattern.permute.xlu0 0
    %203 = vperm.xlu0 %202, %v85
    %v204 = vpop.permute.xlu0 %203
    %207 = vset.pattern.permute.xlu0 0
    %208 = vperm.xlu0 %207, %v86
    %v209 = vpop.permute.xlu0 %208
    %212 = vset.pattern.permute.xlu0 0
    %213 = vperm.xlu0 %212, %v87
    %v214 = vpop.permute.xlu0 %213
    %217 = vset.pattern.permute.xlu0 0
    %218 = vperm.xlu0 %217, %v88
    %v219 = vpop.permute.xlu0 %218
    %222 = vset.pattern.permute.xlu0 0
    %223 = vperm.xlu0 %222, %v89
    %v224 = vpop.permute.xlu0 %223
    %227 = vset.pattern.permute.xlu0 0
    %228 = vperm.xlu0 %227, %v90
    %v229 = vpop.permute.xlu0 %228
    %v259 = vunpack.c.l.b16 %v35
    %v260 = vunpack.c.l.b16 %v36
    %v261 = vunpack.c.l.b16 %v37
    %v262 = vunpack.c.l.b16 %v38
    %v263 = vunpack.c.l.b16 %v39
    %v264 = vunpack.c.l.b16 %v40
    %v265 = vunpack.c.l.b16 %v41
    %v266 = vunpack.c.l.b16 %v42
    %v267 = vunpack.c.l.b16 %v43
    %v268 = vunpack.c.l.b16 %v44
    %v269 = vunpack.c.l.b16 %v45
    %v270 = vunpack.c.l.b16 %v46
    %v271 = vunpack.c.l.b16 %v47
    %v272 = vunpack.c.l.b16 %v48
    %v273 = vunpack.c.l.b16 %v49
    %v274 = vunpack.c.l.b16 %v50
    %v275 = vunpack.c.l.b16 %v51
    %v276 = vunpack.c.l.b16 %v52
    %v277 = vunpack.c.l.b16 %v53
    %v278 = vunpack.c.l.b16 %v54
    %v279 = vunpack.c.l.b16 %v55
    %v280 = vunpack.c.l.b16 %v56
    %v281 = vunpack.c.l.b16 %v57
    %v282 = vunpack.c.l.b16 %v58
    %v283 = vunpack.c.l.b16 %v59
    %v284 = vunpack.c.l.b16 %v60
    %v285 = vunpack.c.l.b16 %v61
    %v286 = vunpack.c.l.b16 %v62
    %v287 = vpack.c.b16 %v260, %v259
    %v288 = vpack.c.b16 %v262, %v261
    %v289 = vpack.c.b16 %v264, %v263
    %v290 = vpack.c.b16 %v266, %v265
    %v291 = vpack.c.b16 %v268, %v267
    %v292 = vpack.c.b16 %v270, %v269
    %v293 = vpack.c.b16 %v272, %v271
    %v294 = vpack.c.b16 %v274, %v273
    %v295 = vpack.c.b16 %v276, %v275
    %v296 = vpack.c.b16 %v278, %v277
    %v297 = vpack.c.b16 %v280, %v279
    %v298 = vpack.c.b16 %v282, %v281
    %v299 = vpack.c.b16 %v284, %v283
    %v300 = vpack.c.b16 %v286, %v285
    %v305 = vunpack.c.l.b16 %v27
    %v306 = vunpack.c.l.b16 %v28
    %v307 = vunpack.c.l.b16 %v29
    %v308 = vunpack.c.l.b16 %v30
    %v309 = vpack.c.b16 %v306, %v305
    %v310 = vpack.c.b16 %v308, %v307
    %vm313 = vcmask 261120
    %v315 = vsel %vm313, %v287, 0
    %v318 = vsel %vm313, %v288, 0
    %v321 = vsel %vm313, %v289, 0
    %v324 = vsel %vm313, %v290, 0
    %v327 = vsel %vm313, %v291, 0
    %v330 = vsel %vm313, %v292, 0
    %v333 = vsel %vm313, %v293, 0
    %v336 = vsel %vm313, %v294, 0
    %v339 = vsel %vm313, %v295, 0
    %v342 = vsel %vm313, %v296, 0
    %v345 = vsel %vm313, %v297, 0
    %v348 = vsel %vm313, %v298, 0
    %v351 = vsel %vm313, %v299, 0
    %v354 = vsel %vm313, %v300, 0
    %356 = vmatpush.bf16.msra.mxu0 0
    %357 = vmatpush.bf16.msra.mxu0 0
    %358 = vmatpush.bf16.msra.mxu0 0
    %359 = vmatpush.bf16.msra.mxu0 0
    %360 = vmatpush.bf16.msra.mxu0 0
    %361 = vmatpush.bf16.msra.mxu0 0
    %362 = vmatpush.bf16.msra.mxu0 %v310
    %363 = vmatpush.bf16.msra.mxu0 %v309
    %364 = vmatmul.bf16.gmra.mxu0 %v315
    %v365 = vpop.f32.mrf.mxu0
    %v366 = vadd.f32 %v94, %v365
    %v367 = vpop.f32.mrf.mxu0
    %v368 = vadd.f32 %v99, %v367
    %369 = vmatmul.bf16.gmra.mxu0 %v318
    %v370 = vpop.f32.mrf.mxu0
    %v371 = vadd.f32 %v104, %v370
    %v372 = vpop.f32.mrf.mxu0
    %v373 = vadd.f32 %v109, %v372
    %374 = vmatmul.bf16.gmra.mxu0 %v321
    %v375 = vpop.f32.mrf.mxu0
    %v376 = vadd.f32 %v114, %v375
    %v377 = vpop.f32.mrf.mxu0
    %v378 = vadd.f32 %v119, %v377
    %379 = vmatmul.bf16.gmra.mxu0 %v324
    %v380 = vpop.f32.mrf.mxu0
    %v381 = vadd.f32 %v124, %v380
    %v382 = vpop.f32.mrf.mxu0
    %v383 = vadd.f32 %v129, %v382
    %384 = vmatmul.bf16.gmra.mxu0 %v327
    %v385 = vpop.f32.mrf.mxu0
    %v386 = vadd.f32 %v134, %v385
    %v387 = vpop.f32.mrf.mxu0
    %v388 = vadd.f32 %v139, %v387
    %389 = vmatmul.bf16.gmra.mxu0 %v330
    %v390 = vpop.f32.mrf.mxu0
    %v391 = vadd.f32 %v144, %v390
    %v392 = vpop.f32.mrf.mxu0
    %v393 = vadd.f32 %v149, %v392
    %394 = vmatmul.bf16.gmra.mxu0 %v333
    %v395 = vpop.f32.mrf.mxu0
    %v396 = vadd.f32 %v154, %v395
    %v397 = vpop.f32.mrf.mxu0
    %v398 = vadd.f32 %v159, %v397
    %399 = vmatmul.bf16.gmra.mxu0 %v336
    %v400 = vpop.f32.mrf.mxu0
    %v401 = vadd.f32 %v164, %v400
    %v402 = vpop.f32.mrf.mxu0
    %v403 = vadd.f32 %v169, %v402
    %404 = vmatmul.bf16.gmra.mxu0 %v339
    %v405 = vpop.f32.mrf.mxu0
    %v406 = vadd.f32 %v174, %v405
    %v407 = vpop.f32.mrf.mxu0
    %v408 = vadd.f32 %v179, %v407
    %409 = vmatmul.bf16.gmra.mxu0 %v342
    %v410 = vpop.f32.mrf.mxu0
    %v411 = vadd.f32 %v184, %v410
    %v412 = vpop.f32.mrf.mxu0
    %v413 = vadd.f32 %v189, %v412
    %414 = vmatmul.bf16.gmra.mxu0 %v345
    %v415 = vpop.f32.mrf.mxu0
    %v416 = vadd.f32 %v194, %v415
    %v417 = vpop.f32.mrf.mxu0
    %v418 = vadd.f32 %v199, %v417
    %419 = vmatmul.bf16.gmra.mxu0 %v348
    %v420 = vpop.f32.mrf.mxu0
    %v421 = vadd.f32 %v204, %v420
    %v422 = vpop.f32.mrf.mxu0
    %v423 = vadd.f32 %v209, %v422
    %424 = vmatmul.bf16.gmra.mxu0 %v351
    %v425 = vpop.f32.mrf.mxu0
    %v426 = vadd.f32 %v214, %v425
    %v427 = vpop.f32.mrf.mxu0
    %v428 = vadd.f32 %v219, %v427
    %429 = vmatmul.bf16.gmra.mxu0 %v354
    %v430 = vpop.f32.mrf.mxu0
    %v431 = vadd.f32 %v224, %v430
    %v432 = vpop.f32.mrf.mxu0
    %v433 = vadd.f32 %v229, %v432
    %434 = vdwg.mxu0
    %v435 = vand.u32 2147483647, %v366
    %v436 = vand.u32 2147483647, %v368
    %v437 = vand.u32 2147483647, %v371
    %v438 = vand.u32 2147483647, %v373
    %v439 = vand.u32 2147483647, %v376
    %v440 = vand.u32 2147483647, %v378
    %v441 = vand.u32 2147483647, %v381
    %v442 = vand.u32 2147483647, %v383
    %v443 = vand.u32 2147483647, %v386
    %v444 = vand.u32 2147483647, %v388
    %v445 = vand.u32 2147483647, %v391
    %v446 = vand.u32 2147483647, %v393
    %v447 = vand.u32 2147483647, %v396
    %v448 = vand.u32 2147483647, %v398
    %v449 = vand.u32 2147483647, %v401
    %v450 = vand.u32 2147483647, %v403
    %v451 = vand.u32 2147483647, %v416
    %v452 = vand.u32 2147483647, %v418
    %v453 = vand.u32 2147483647, %v421
    %v454 = vand.u32 2147483647, %v423
    %v455 = vmax.f32 %v426, 0.0
    %v456 = vmax.f32 %v428, 0.0
    %v457 = vmax.f32 %v431, 0.0
    %v458 = vmax.f32 %v433, 0.0
    %v459 = vld [vmem:[%s4] sm:$0xff]
    %v460 = vld [vmem:[%s4 + $0x8] sm:$0xff]
    %v461 = vld [vmem:[%s4 + $0x10] sm:$0xff]
    %v462 = vld [vmem:[%s4 + $0x18] sm:$0xff]
    %464 = vset.pattern.permute.xlu0 0
    %465 = vperm.xlu0 %464, %v459
    %v466 = vpop.permute.xlu0 %465
    %469 = vset.pattern.permute.xlu0 0
    %470 = vperm.xlu0 %469, %v460
    %v471 = vpop.permute.xlu0 %470
    %474 = vset.pattern.permute.xlu0 0
    %475 = vperm.xlu0 %474, %v461
    %v476 = vpop.permute.xlu0 %475
    %479 = vset.pattern.permute.xlu0 0
    %480 = vperm.xlu0 %479, %v462
    %v481 = vpop.permute.xlu0 %480
    %v483 = vmul.f32 %v455, %v466
    %v484 = vmul.f32 %v456, %v471
    %v485 = vmul.f32 %v457, %v476
    %v486 = vmul.f32 %v458, %v481
    %v487 = vadd.f32 %v483, %v484
    %v488 = vadd.f32 %v487, %v485
    %v489 = vadd.f32 %v488, %v486
    %v490 = vrot.slane %v489, 4
    %v491 = vadd.f32 %v489, %v490
    %v492 = vrot.slane %v491, 2
    %v493 = vadd.f32 %v491, %v492
    %v494 = vrot.slane %v493, 1
    %v495 = vadd.f32 %v493, %v494
    %v496 = vld [vmem:[#allocation2] sm:$0x1]
    %498 = vset.pattern.permute.xlu0 0
    %499 = vperm.xlu0 %498, %v496
    %v500 = vpop.permute.xlu0 %499
    %v502 = vperm.slane %v500, 0
    %v503 = vadd.f32 %v495, %v502
    %v504 = vperm.slane %v31, 0
    %v505 = vmul.f32 %v504, %v435
    %v506 = vmul.f32 %v504, %v436
    %v507 = vmul.f32 %v504, %v437
    %v508 = vmul.f32 %v504, %v438
    %v509 = vadd.f32 %v406, %v505
    %v510 = vadd.f32 %v408, %v506
    %v511 = vadd.f32 %v411, %v507
    %v512 = vadd.f32 %v413, %v508
    %v513 = vperm.slane %v32, 0
    %v514 = vmul.f32 %v513, %v439
    %v515 = vmul.f32 %v513, %v440
    %v516 = vmul.f32 %v513, %v441
    %v517 = vmul.f32 %v513, %v442
    %v518 = vadd.f32 %v509, %v514
    %v519 = vadd.f32 %v510, %v515
    %v520 = vadd.f32 %v511, %v516
    %v521 = vadd.f32 %v512, %v517
    %v522 = vperm.slane %v33, 0
    %v523 = vmul.f32 %v522, %v443
    %v524 = vmul.f32 %v522, %v444
    %v525 = vmul.f32 %v522, %v445
    %v526 = vmul.f32 %v522, %v446
    %v527 = vadd.f32 %v518, %v523
    %v528 = vadd.f32 %v519, %v524
    %v529 = vadd.f32 %v520, %v525
    %v530 = vadd.f32 %v521, %v526
    %v531 = vperm.slane %v34, 0
    %v532 = vmul.f32 %v531, %v447
    %v533 = vmul.f32 %v531, %v448
    %v534 = vmul.f32 %v531, %v449
    %v535 = vmul.f32 %v531, %v450
    %v536 = vadd.f32 %v527, %v532
    %v537 = vadd.f32 %v528, %v533
    %v538 = vadd.f32 %v529, %v534
    %v539 = vadd.f32 %v530, %v535
    %v540 = vmul.f32 %v536, 0.041666668
    %v541 = vmul.f32 %v537, 0.041666668
    %v542 = vmul.f32 %v538, 0.041666668
    %v543 = vmul.f32 %v539, 0.041666668
    %v544 = vadd.f32 %v540, 0.16666667
    %v545 = vadd.f32 %v541, 0.16666667
    %v546 = vadd.f32 %v542, 0.16666667
    %v547 = vadd.f32 %v543, 0.16666667
    %v548 = vmul.f32 %v536, %v544
    %v549 = vmul.f32 %v537, %v545
    %v550 = vmul.f32 %v538, %v546
    %v551 = vmul.f32 %v539, %v547
    %v552 = vadd.f32 %v548, 0.5
    %v553 = vadd.f32 %v549, 0.5
    %v554 = vadd.f32 %v550, 0.5
    %v555 = vadd.f32 %v551, 0.5
    %v556 = vmul.f32 %v536, %v552
    %v557 = vmul.f32 %v537, %v553
    %v558 = vmul.f32 %v538, %v554
    %v559 = vmul.f32 %v539, %v555
    %v560 = vadd.f32 %v556, 1.0
    %v561 = vadd.f32 %v557, 1.0
    %v562 = vadd.f32 %v558, 1.0
    %v563 = vadd.f32 %v559, 1.0
    %v564 = vmul.f32 %v536, %v560
    %v565 = vmul.f32 %v537, %v561
    %v566 = vmul.f32 %v538, %v562
    %v567 = vmul.f32 %v539, %v563
    %vm568 = vcmp.gt.f32.partialorder %v536, -0.0625
    %vm569 = vcmp.gt.f32.partialorder %v537, -0.0625
    %vm570 = vcmp.gt.f32.partialorder %v538, -0.0625
    %vm571 = vcmp.gt.f32.partialorder %v539, -0.0625
    %v572 = vmul.f32 %v536, 1.442695
    %v573 = vpow.pop %v572
    %v574 = vmul.f32 %v537, 1.442695
    %v575 = vpow.pop %v574
    %v576 = vmul.f32 %v538, 1.442695
    %v577 = vpow.pop %v576
    %v578 = vmul.f32 %v539, 1.442695
    %v579 = vpow.pop %v578
    %v580 = vsub.f32 %v573, 1.0
    %v581 = vsub.f32 %v575, 1.0
    %v582 = vsub.f32 %v577, 1.0
    %v583 = vsub.f32 %v579, 1.0
    %v584 = vsel %vm568, %v564, %v580
    %v585 = vsel %vm569, %v565, %v581
    %v586 = vsel %vm570, %v566, %v582
    %v587 = vsel %vm571, %v567, %v583
    %vm588 = vcmp.gt.f32.partialorder %v536, 0.0
    %vm589 = vcmp.gt.f32.partialorder %v537, 0.0
    %vm590 = vcmp.gt.f32.partialorder %v538, 0.0
    %vm591 = vcmp.gt.f32.partialorder %v539, 0.0
    %v592 = vsel %vm588, %v536, %v584
    %v593 = vsel %vm589, %v537, %v585
    %v594 = vsel %vm590, %v538, %v586
    %v595 = vsel %vm591, %v539, %v587
    %v596 = vmul.f32 %v592, %v451
    %v597 = vmul.f32 %v593, %v452
    %v598 = vmul.f32 %v594, %v453
    %v599 = vmul.f32 %v595, %v454
    %v600 = vadd.f32 %v596, %v597
    %v601 = vadd.f32 %v600, %v598
    %v602 = vadd.f32 %v601, %v599
    %v603 = vrot.slane %v602, 4
    %v604 = vadd.f32 %v602, %v603
    %v605 = vrot.slane %v604, 2
    %v606 = vadd.f32 %v604, %v605
    %v607 = vrot.slane %v606, 1
    %v608 = vadd.f32 %v606, %v607
    %v609 = vadd.f32 %v608, %v503
    %610 = vst [vmem:[#allocation3] sm:$0x1] %v609
    %v611 = vperm.slane %v31, 1
    %v612 = vmul.f32 %v611, %v435
    %v613 = vmul.f32 %v611, %v436
    %v614 = vmul.f32 %v611, %v437
    %v615 = vmul.f32 %v611, %v438
    %v616 = vadd.f32 %v406, %v612
    %v617 = vadd.f32 %v408, %v613
    %v618 = vadd.f32 %v411, %v614
    %v619 = vadd.f32 %v413, %v615
    %v620 = vperm.slane %v32, 1
    %v621 = vmul.f32 %v620, %v439
    %v622 = vmul.f32 %v620, %v440
    %v623 = vmul.f32 %v620, %v441
    %v624 = vmul.f32 %v620, %v442
    %v625 = vadd.f32 %v616, %v621
    %v626 = vadd.f32 %v617, %v622
    %v627 = vadd.f32 %v618, %v623
    %v628 = vadd.f32 %v619, %v624
    %v629 = vperm.slane %v33, 1
    %v630 = vmul.f32 %v629, %v443
    %v631 = vmul.f32 %v629, %v444
    %v632 = vmul.f32 %v629, %v445
    %v633 = vmul.f32 %v629, %v446
    %v634 = vadd.f32 %v625, %v630
    %v635 = vadd.f32 %v626, %v631
    %v636 = vadd.f32 %v627, %v632
    %v637 = vadd.f32 %v628, %v633
    %v638 = vperm.slane %v34, 1
    %v639 = vmul.f32 %v638, %v447
    %v640 = vmul.f32 %v638, %v448
    %v641 = vmul.f32 %v638, %v449
    %v642 = vmul.f32 %v638, %v450
    %v643 = vadd.f32 %v634, %v639
    %v644 = vadd.f32 %v635, %v640
    %v645 = vadd.f32 %v636, %v641
    %v646 = vadd.f32 %v637, %v642
    %v647 = vmul.f32 %v643, 0.041666668
    %v648 = vmul.f32 %v644, 0.041666668
    %v649 = vmul.f32 %v645, 0.041666668
    %v650 = vmul.f32 %v646, 0.041666668
    %v651 = vadd.f32 %v647, 0.16666667
    %v652 = vadd.f32 %v648, 0.16666667
    %v653 = vadd.f32 %v649, 0.16666667
    %v654 = vadd.f32 %v650, 0.16666667
    %v655 = vmul.f32 %v643, %v651
    %v656 = vmul.f32 %v644, %v652
    %v657 = vmul.f32 %v645, %v653
    %v658 = vmul.f32 %v646, %v654
    %v659 = vadd.f32 %v655, 0.5
    %v660 = vadd.f32 %v656, 0.5
    %v661 = vadd.f32 %v657, 0.5
    %v662 = vadd.f32 %v658, 0.5
    %v663 = vmul.f32 %v643, %v659
    %v664 = vmul.f32 %v644, %v660
    %v665 = vmul.f32 %v645, %v661
    %v666 = vmul.f32 %v646, %v662
    %v667 = vadd.f32 %v663, 1.0
    %v668 = vadd.f32 %v664, 1.0
    %v669 = vadd.f32 %v665, 1.0
    %v670 = vadd.f32 %v666, 1.0
    %v671 = vmul.f32 %v643, %v667
    %v672 = vmul.f32 %v644, %v668
    %v673 = vmul.f32 %v645, %v669
    %v674 = vmul.f32 %v646, %v670
    %vm675 = vcmp.gt.f32.partialorder %v643, -0.0625
    %vm676 = vcmp.gt.f32.partialorder %v644, -0.0625
    %vm677 = vcmp.gt.f32.partialorder %v645, -0.0625
    %vm678 = vcmp.gt.f32.partialorder %v646, -0.0625
    %v679 = vmul.f32 %v643, 1.442695
    %v680 = vpow.pop %v679
    %v681 = vmul.f32 %v644, 1.442695
    %v682 = vpow.pop %v681
    %v683 = vmul.f32 %v645, 1.442695
    %v684 = vpow.pop %v683
    %v685 = vmul.f32 %v646, 1.442695
    %v686 = vpow.pop %v685
    %v687 = vsub.f32 %v680, 1.0
    %v688 = vsub.f32 %v682, 1.0
    %v689 = vsub.f32 %v684, 1.0
    %v690 = vsub.f32 %v686, 1.0
    %v691 = vsel %vm675, %v671, %v687
    %v692 = vsel %vm676, %v672, %v688
    %v693 = vsel %vm677, %v673, %v689
    %v694 = vsel %vm678, %v674, %v690
    %vm695 = vcmp.gt.f32.partialorder %v643, 0.0
    %vm696 = vcmp.gt.f32.partialorder %v644, 0.0
    %vm697 = vcmp.gt.f32.partialorder %v645, 0.0
    %vm698 = vcmp.gt.f32.partialorder %v646, 0.0
    %v699 = vsel %vm695, %v643, %v691
    %v700 = vsel %vm696, %v644, %v692
    %v701 = vsel %vm697, %v645, %v693
    %v702 = vsel %vm698, %v646, %v694
    %v703 = vmul.f32 %v699, %v451
    %v704 = vmul.f32 %v700, %v452
    %v705 = vmul.f32 %v701, %v453
    %v706 = vmul.f32 %v702, %v454
    %v707 = vadd.f32 %v703, %v704
    %v708 = vadd.f32 %v707, %v705
    %v709 = vadd.f32 %v708, %v706
    %v710 = vrot.slane %v709, 4
    %v711 = vadd.f32 %v709, %v710
    %v712 = vrot.slane %v711, 2
    %v713 = vadd.f32 %v711, %v712
    %v714 = vrot.slane %v713, 1
    %v715 = vadd.f32 %v713, %v714
    %v716 = vadd.f32 %v715, %v503
    %717 = vst [vmem:[#allocation3 + $0x1] sm:$0x1] %v716
    %v718 = vperm.slane %v31, 2
    %v719 = vmul.f32 %v718, %v435
    %v720 = vmul.f32 %v718, %v436
    %v721 = vmul.f32 %v718, %v437
    %v722 = vmul.f32 %v718, %v438
    %v723 = vadd.f32 %v406, %v719
    %v724 = vadd.f32 %v408, %v720
    %v725 = vadd.f32 %v411, %v721
    %v726 = vadd.f32 %v413, %v722
    %v727 = vperm.slane %v32, 2
    %v728 = vmul.f32 %v727, %v439
    %v729 = vmul.f32 %v727, %v440
    %v730 = vmul.f32 %v727, %v441
    %v731 = vmul.f32 %v727, %v442
    %v732 = vadd.f32 %v723, %v728
    %v733 = vadd.f32 %v724, %v729
    %v734 = vadd.f32 %v725, %v730
    %v735 = vadd.f32 %v726, %v731
    %v736 = vperm.slane %v33, 2
    %v737 = vmul.f32 %v736, %v443
    %v738 = vmul.f32 %v736, %v444
    %v739 = vmul.f32 %v736, %v445
    %v740 = vmul.f32 %v736, %v446
    %v741 = vadd.f32 %v732, %v737
    %v742 = vadd.f32 %v733, %v738
    %v743 = vadd.f32 %v734, %v739
    %v744 = vadd.f32 %v735, %v740
    %v745 = vperm.slane %v34, 2
    %v746 = vmul.f32 %v745, %v447
    %v747 = vmul.f32 %v745, %v448
    %v748 = vmul.f32 %v745, %v449
    %v749 = vmul.f32 %v745, %v450
    %v750 = vadd.f32 %v741, %v746
    %v751 = vadd.f32 %v742, %v747
    %v752 = vadd.f32 %v743, %v748
    %v753 = vadd.f32 %v744, %v749
    %v754 = vmul.f32 %v750, 0.041666668
    %v755 = vmul.f32 %v751, 0.041666668
    %v756 = vmul.f32 %v752, 0.041666668
    %v757 = vmul.f32 %v753, 0.041666668
    %v758 = vadd.f32 %v754, 0.16666667
    %v759 = vadd.f32 %v755, 0.16666667
    %v760 = vadd.f32 %v756, 0.16666667
    %v761 = vadd.f32 %v757, 0.16666667
    %v762 = vmul.f32 %v750, %v758
    %v763 = vmul.f32 %v751, %v759
    %v764 = vmul.f32 %v752, %v760
    %v765 = vmul.f32 %v753, %v761
    %v766 = vadd.f32 %v762, 0.5
    %v767 = vadd.f32 %v763, 0.5
    %v768 = vadd.f32 %v764, 0.5
    %v769 = vadd.f32 %v765, 0.5
    %v770 = vmul.f32 %v750, %v766
    %v771 = vmul.f32 %v751, %v767
    %v772 = vmul.f32 %v752, %v768
    %v773 = vmul.f32 %v753, %v769
    %v774 = vadd.f32 %v770, 1.0
    %v775 = vadd.f32 %v771, 1.0
    %v776 = vadd.f32 %v772, 1.0
    %v777 = vadd.f32 %v773, 1.0
    %v778 = vmul.f32 %v750, %v774
    %v779 = vmul.f32 %v751, %v775
    %v780 = vmul.f32 %v752, %v776
    %v781 = vmul.f32 %v753, %v777
    %vm782 = vcmp.gt.f32.partialorder %v750, -0.0625
    %vm783 = vcmp.gt.f32.partialorder %v751, -0.0625
    %vm784 = vcmp.gt.f32.partialorder %v752, -0.0625
    %vm785 = vcmp.gt.f32.partialorder %v753, -0.0625
    %v786 = vmul.f32 %v750, 1.442695
    %v787 = vpow.pop %v786
    %v788 = vmul.f32 %v751, 1.442695
    %v789 = vpow.pop %v788
    %v790 = vmul.f32 %v752, 1.442695
    %v791 = vpow.pop %v790
    %v792 = vmul.f32 %v753, 1.442695
    %v793 = vpow.pop %v792
    %v794 = vsub.f32 %v787, 1.0
    %v795 = vsub.f32 %v789, 1.0
    %v796 = vsub.f32 %v791, 1.0
    %v797 = vsub.f32 %v793, 1.0
    %v798 = vsel %vm782, %v778, %v794
    %v799 = vsel %vm783, %v779, %v795
    %v800 = vsel %vm784, %v780, %v796
    %v801 = vsel %vm785, %v781, %v797
    %vm802 = vcmp.gt.f32.partialorder %v750, 0.0
    %vm803 = vcmp.gt.f32.partialorder %v751, 0.0
    %vm804 = vcmp.gt.f32.partialorder %v752, 0.0
    %vm805 = vcmp.gt.f32.partialorder %v753, 0.0
    %v806 = vsel %vm802, %v750, %v798
    %v807 = vsel %vm803, %v751, %v799
    %v808 = vsel %vm804, %v752, %v800
    %v809 = vsel %vm805, %v753, %v801
    %v810 = vmul.f32 %v806, %v451
    %v811 = vmul.f32 %v807, %v452
    %v812 = vmul.f32 %v808, %v453
    %v813 = vmul.f32 %v809, %v454
    %v814 = vadd.f32 %v810, %v811
    %v815 = vadd.f32 %v814, %v812
    %v816 = vadd.f32 %v815, %v813
    %v817 = vrot.slane %v816, 4
    %v818 = vadd.f32 %v816, %v817
    %v819 = vrot.slane %v818, 2
    %v820 = vadd.f32 %v818, %v819
    %v821 = vrot.slane %v820, 1
    %v822 = vadd.f32 %v820, %v821
    %v823 = vadd.f32 %v822, %v503
    %824 = vst [vmem:[#allocation3 + $0x2] sm:$0x1] %v823
    %v825 = vperm.slane %v31, 3
    %v826 = vmul.f32 %v825, %v435
    %v827 = vmul.f32 %v825, %v436
    %v828 = vmul.f32 %v825, %v437
    %v829 = vmul.f32 %v825, %v438
    %v830 = vadd.f32 %v406, %v826
    %v831 = vadd.f32 %v408, %v827
    %v832 = vadd.f32 %v411, %v828
    %v833 = vadd.f32 %v413, %v829
    %v834 = vperm.slane %v32, 3
    %v835 = vmul.f32 %v834, %v439
    %v836 = vmul.f32 %v834, %v440
    %v837 = vmul.f32 %v834, %v441
    %v838 = vmul.f32 %v834, %v442
    %v839 = vadd.f32 %v830, %v835
    %v840 = vadd.f32 %v831, %v836
    %v841 = vadd.f32 %v832, %v837
    %v842 = vadd.f32 %v833, %v838
    %v843 = vperm.slane %v33, 3
    %v844 = vmul.f32 %v843, %v443
    %v845 = vmul.f32 %v843, %v444
    %v846 = vmul.f32 %v843, %v445
    %v847 = vmul.f32 %v843, %v446
    %v848 = vadd.f32 %v839, %v844
    %v849 = vadd.f32 %v840, %v845
    %v850 = vadd.f32 %v841, %v846
    %v851 = vadd.f32 %v842, %v847
    %v852 = vperm.slane %v34, 3
    %v853 = vmul.f32 %v852, %v447
    %v854 = vmul.f32 %v852, %v448
    %v855 = vmul.f32 %v852, %v449
    %v856 = vmul.f32 %v852, %v450
    %v857 = vadd.f32 %v848, %v853
    %v858 = vadd.f32 %v849, %v854
    %v859 = vadd.f32 %v850, %v855
    %v860 = vadd.f32 %v851, %v856
    %v861 = vmul.f32 %v857, 0.041666668
    %v862 = vmul.f32 %v858, 0.041666668
    %v863 = vmul.f32 %v859, 0.041666668
    %v864 = vmul.f32 %v860, 0.041666668
    %v865 = vadd.f32 %v861, 0.16666667
    %v866 = vadd.f32 %v862, 0.16666667
    %v867 = vadd.f32 %v863, 0.16666667
    %v868 = vadd.f32 %v864, 0.16666667
    %v869 = vmul.f32 %v857, %v865
    %v870 = vmul.f32 %v858, %v866
    %v871 = vmul.f32 %v859, %v867
    %v872 = vmul.f32 %v860, %v868
    %v873 = vadd.f32 %v869, 0.5
    %v874 = vadd.f32 %v870, 0.5
    %v875 = vadd.f32 %v871, 0.5
    %v876 = vadd.f32 %v872, 0.5
    %v877 = vmul.f32 %v857, %v873
    %v878 = vmul.f32 %v858, %v874
    %v879 = vmul.f32 %v859, %v875
    %v880 = vmul.f32 %v860, %v876
    %v881 = vadd.f32 %v877, 1.0
    %v882 = vadd.f32 %v878, 1.0
    %v883 = vadd.f32 %v879, 1.0
    %v884 = vadd.f32 %v880, 1.0
    %v885 = vmul.f32 %v857, %v881
    %v886 = vmul.f32 %v858, %v882
    %v887 = vmul.f32 %v859, %v883
    %v888 = vmul.f32 %v860, %v884
    %vm889 = vcmp.gt.f32.partialorder %v857, -0.0625
    %vm890 = vcmp.gt.f32.partialorder %v858, -0.0625
    %vm891 = vcmp.gt.f32.partialorder %v859, -0.0625
    %vm892 = vcmp.gt.f32.partialorder %v860, -0.0625
    %v893 = vmul.f32 %v857, 1.442695
    %v894 = vpow.pop %v893
    %v895 = vmul.f32 %v858, 1.442695
    %v896 = vpow.pop %v895
    %v897 = vmul.f32 %v859, 1.442695
    %v898 = vpow.pop %v897
    %v899 = vmul.f32 %v860, 1.442695
    %v900 = vpow.pop %v899
    %v901 = vsub.f32 %v894, 1.0
    %v902 = vsub.f32 %v896, 1.0
    %v903 = vsub.f32 %v898, 1.0
    %v904 = vsub.f32 %v900, 1.0
    %v905 = vsel %vm889, %v885, %v901
    %v906 = vsel %vm890, %v886, %v902
    %v907 = vsel %vm891, %v887, %v903
    %v908 = vsel %vm892, %v888, %v904
    %vm909 = vcmp.gt.f32.partialorder %v857, 0.0
    %vm910 = vcmp.gt.f32.partialorder %v858, 0.0
    %vm911 = vcmp.gt.f32.partialorder %v859, 0.0
    %vm912 = vcmp.gt.f32.partialorder %v860, 0.0
    %v913 = vsel %vm909, %v857, %v905
    %v914 = vsel %vm910, %v858, %v906
    %v915 = vsel %vm911, %v859, %v907
    %v916 = vsel %vm912, %v860, %v908
    %v917 = vmul.f32 %v913, %v451
    %v918 = vmul.f32 %v914, %v452
    %v919 = vmul.f32 %v915, %v453
    %v920 = vmul.f32 %v916, %v454
    %v921 = vadd.f32 %v917, %v918
    %v922 = vadd.f32 %v921, %v919
    %v923 = vadd.f32 %v922, %v920
    %v924 = vrot.slane %v923, 4
    %v925 = vadd.f32 %v923, %v924
    %v926 = vrot.slane %v925, 2
    %v927 = vadd.f32 %v925, %v926
    %v928 = vrot.slane %v927, 1
    %v929 = vadd.f32 %v927, %v928
    %v930 = vadd.f32 %v929, %v503
    %931 = vst [vmem:[#allocation3 + $0x3] sm:$0x1] %v930
    %v932 = vperm.slane %v31, 4
    %v933 = vmul.f32 %v932, %v435
    %v934 = vmul.f32 %v932, %v436
    %v935 = vmul.f32 %v932, %v437
    %v936 = vmul.f32 %v932, %v438
    %v937 = vadd.f32 %v406, %v933
    %v938 = vadd.f32 %v408, %v934
    %v939 = vadd.f32 %v411, %v935
    %v940 = vadd.f32 %v413, %v936
    %v941 = vperm.slane %v32, 4
    %v942 = vmul.f32 %v941, %v439
    %v943 = vmul.f32 %v941, %v440
    %v944 = vmul.f32 %v941, %v441
    %v945 = vmul.f32 %v941, %v442
    %v946 = vadd.f32 %v937, %v942
    %v947 = vadd.f32 %v938, %v943
    %v948 = vadd.f32 %v939, %v944
    %v949 = vadd.f32 %v940, %v945
    %v950 = vperm.slane %v33, 4
    %v951 = vmul.f32 %v950, %v443
    %v952 = vmul.f32 %v950, %v444
    %v953 = vmul.f32 %v950, %v445
    %v954 = vmul.f32 %v950, %v446
    %v955 = vadd.f32 %v946, %v951
    %v956 = vadd.f32 %v947, %v952
    %v957 = vadd.f32 %v948, %v953
    %v958 = vadd.f32 %v949, %v954
    %v959 = vperm.slane %v34, 4
    %v960 = vmul.f32 %v959, %v447
    %v961 = vmul.f32 %v959, %v448
    %v962 = vmul.f32 %v959, %v449
    %v963 = vmul.f32 %v959, %v450
    %v964 = vadd.f32 %v955, %v960
    %v965 = vadd.f32 %v956, %v961
    %v966 = vadd.f32 %v957, %v962
    %v967 = vadd.f32 %v958, %v963
    %v968 = vmul.f32 %v964, 0.041666668
    %v969 = vmul.f32 %v965, 0.041666668
    %v970 = vmul.f32 %v966, 0.041666668
    %v971 = vmul.f32 %v967, 0.041666668
    %v972 = vadd.f32 %v968, 0.16666667
    %v973 = vadd.f32 %v969, 0.16666667
    %v974 = vadd.f32 %v970, 0.16666667
    %v975 = vadd.f32 %v971, 0.16666667
    %v976 = vmul.f32 %v964, %v972
    %v977 = vmul.f32 %v965, %v973
    %v978 = vmul.f32 %v966, %v974
    %v979 = vmul.f32 %v967, %v975
    %v980 = vadd.f32 %v976, 0.5
    %v981 = vadd.f32 %v977, 0.5
    %v982 = vadd.f32 %v978, 0.5
    %v983 = vadd.f32 %v979, 0.5
    %v984 = vmul.f32 %v964, %v980
    %v985 = vmul.f32 %v965, %v981
    %v986 = vmul.f32 %v966, %v982
    %v987 = vmul.f32 %v967, %v983
    %v988 = vadd.f32 %v984, 1.0
    %v989 = vadd.f32 %v985, 1.0
    %v990 = vadd.f32 %v986, 1.0
    %v991 = vadd.f32 %v987, 1.0
    %v992 = vmul.f32 %v964, %v988
    %v993 = vmul.f32 %v965, %v989
    %v994 = vmul.f32 %v966, %v990
    %v995 = vmul.f32 %v967, %v991
    %vm996 = vcmp.gt.f32.partialorder %v964, -0.0625
    %vm997 = vcmp.gt.f32.partialorder %v965, -0.0625
    %vm998 = vcmp.gt.f32.partialorder %v966, -0.0625
    %vm999 = vcmp.gt.f32.partialorder %v967, -0.0625
    %v1000 = vmul.f32 %v964, 1.442695
    %v1001 = vpow.pop %v1000
    %v1002 = vmul.f32 %v965, 1.442695
    %v1003 = vpow.pop %v1002
    %v1004 = vmul.f32 %v966, 1.442695
    %v1005 = vpow.pop %v1004
    %v1006 = vmul.f32 %v967, 1.442695
    %v1007 = vpow.pop %v1006
    %v1008 = vsub.f32 %v1001, 1.0
    %v1009 = vsub.f32 %v1003, 1.0
    %v1010 = vsub.f32 %v1005, 1.0
    %v1011 = vsub.f32 %v1007, 1.0
    %v1012 = vsel %vm996, %v992, %v1008
    %v1013 = vsel %vm997, %v993, %v1009
    %v1014 = vsel %vm998, %v994, %v1010
    %v1015 = vsel %vm999, %v995, %v1011
    %vm1016 = vcmp.gt.f32.partialorder %v964, 0.0
    %vm1017 = vcmp.gt.f32.partialorder %v965, 0.0
    %vm1018 = vcmp.gt.f32.partialorder %v966, 0.0
    %vm1019 = vcmp.gt.f32.partialorder %v967, 0.0
    %v1020 = vsel %vm1016, %v964, %v1012
    %v1021 = vsel %vm1017, %v965, %v1013
    %v1022 = vsel %vm1018, %v966, %v1014
    %v1023 = vsel %vm1019, %v967, %v1015
    %v1024 = vmul.f32 %v1020, %v451
    %v1025 = vmul.f32 %v1021, %v452
    %v1026 = vmul.f32 %v1022, %v453
    %v1027 = vmul.f32 %v1023, %v454
    %v1028 = vadd.f32 %v1024, %v1025
    %v1029 = vadd.f32 %v1028, %v1026
    %v1030 = vadd.f32 %v1029, %v1027
    %v1031 = vrot.slane %v1030, 4
    %v1032 = vadd.f32 %v1030, %v1031
    %v1033 = vrot.slane %v1032, 2
    %v1034 = vadd.f32 %v1032, %v1033
    %v1035 = vrot.slane %v1034, 1
    %v1036 = vadd.f32 %v1034, %v1035
    %v1037 = vadd.f32 %v1036, %v503
    %1038 = vst [vmem:[#allocation3 + $0x4] sm:$0x1] %v1037
    %v1039 = vperm.slane %v31, 5
    %v1040 = vmul.f32 %v1039, %v435
    %v1041 = vmul.f32 %v1039, %v436
    %v1042 = vmul.f32 %v1039, %v437
    %v1043 = vmul.f32 %v1039, %v438
    %v1044 = vadd.f32 %v406, %v1040
    %v1045 = vadd.f32 %v408, %v1041
    %v1046 = vadd.f32 %v411, %v1042
    %v1047 = vadd.f32 %v413, %v1043
    %v1048 = vperm.slane %v32, 5
    %v1049 = vmul.f32 %v1048, %v439
    %v1050 = vmul.f32 %v1048, %v440
    %v1051 = vmul.f32 %v1048, %v441
    %v1052 = vmul.f32 %v1048, %v442
    %v1053 = vadd.f32 %v1044, %v1049
    %v1054 = vadd.f32 %v1045, %v1050
    %v1055 = vadd.f32 %v1046, %v1051
    %v1056 = vadd.f32 %v1047, %v1052
    %v1057 = vperm.slane %v33, 5
    %v1058 = vmul.f32 %v1057, %v443
    %v1059 = vmul.f32 %v1057, %v444
    %v1060 = vmul.f32 %v1057, %v445
    %v1061 = vmul.f32 %v1057, %v446
    %v1062 = vadd.f32 %v1053, %v1058
    %v1063 = vadd.f32 %v1054, %v1059
    %v1064 = vadd.f32 %v1055, %v1060
    %v1065 = vadd.f32 %v1056, %v1061
    %v1066 = vperm.slane %v34, 5
    %v1067 = vmul.f32 %v1066, %v447
    %v1068 = vmul.f32 %v1066, %v448
    %v1069 = vmul.f32 %v1066, %v449
    %v1070 = vmul.f32 %v1066, %v450
    %v1071 = vadd.f32 %v1062, %v1067
    %v1072 = vadd.f32 %v1063, %v1068
    %v1073 = vadd.f32 %v1064, %v1069
    %v1074 = vadd.f32 %v1065, %v1070
    %v1075 = vmul.f32 %v1071, 0.041666668
    %v1076 = vmul.f32 %v1072, 0.041666668
    %v1077 = vmul.f32 %v1073, 0.041666668
    %v1078 = vmul.f32 %v1074, 0.041666668
    %v1079 = vadd.f32 %v1075, 0.16666667
    %v1080 = vadd.f32 %v1076, 0.16666667
    %v1081 = vadd.f32 %v1077, 0.16666667
    %v1082 = vadd.f32 %v1078, 0.16666667
    %v1083 = vmul.f32 %v1071, %v1079
    %v1084 = vmul.f32 %v1072, %v1080
    %v1085 = vmul.f32 %v1073, %v1081
    %v1086 = vmul.f32 %v1074, %v1082
    %v1087 = vadd.f32 %v1083, 0.5
    %v1088 = vadd.f32 %v1084, 0.5
    %v1089 = vadd.f32 %v1085, 0.5
    %v1090 = vadd.f32 %v1086, 0.5
    %v1091 = vmul.f32 %v1071, %v1087
    %v1092 = vmul.f32 %v1072, %v1088
    %v1093 = vmul.f32 %v1073, %v1089
    %v1094 = vmul.f32 %v1074, %v1090
    %v1095 = vadd.f32 %v1091, 1.0
    %v1096 = vadd.f32 %v1092, 1.0
    %v1097 = vadd.f32 %v1093, 1.0
    %v1098 = vadd.f32 %v1094, 1.0
    %v1099 = vmul.f32 %v1071, %v1095
    %v1100 = vmul.f32 %v1072, %v1096
    %v1101 = vmul.f32 %v1073, %v1097
    %v1102 = vmul.f32 %v1074, %v1098
    %vm1103 = vcmp.gt.f32.partialorder %v1071, -0.0625
    %vm1104 = vcmp.gt.f32.partialorder %v1072, -0.0625
    %vm1105 = vcmp.gt.f32.partialorder %v1073, -0.0625
    %vm1106 = vcmp.gt.f32.partialorder %v1074, -0.0625
    %v1107 = vmul.f32 %v1071, 1.442695
    %v1108 = vpow.pop %v1107
    %v1109 = vmul.f32 %v1072, 1.442695
    %v1110 = vpow.pop %v1109
    %v1111 = vmul.f32 %v1073, 1.442695
    %v1112 = vpow.pop %v1111
    %v1113 = vmul.f32 %v1074, 1.442695
    %v1114 = vpow.pop %v1113
    %v1115 = vsub.f32 %v1108, 1.0
    %v1116 = vsub.f32 %v1110, 1.0
    %v1117 = vsub.f32 %v1112, 1.0
    %v1118 = vsub.f32 %v1114, 1.0
    %v1119 = vsel %vm1103, %v1099, %v1115
    %v1120 = vsel %vm1104, %v1100, %v1116
    %v1121 = vsel %vm1105, %v1101, %v1117
    %v1122 = vsel %vm1106, %v1102, %v1118
    %vm1123 = vcmp.gt.f32.partialorder %v1071, 0.0
    %vm1124 = vcmp.gt.f32.partialorder %v1072, 0.0
    %vm1125 = vcmp.gt.f32.partialorder %v1073, 0.0
    %vm1126 = vcmp.gt.f32.partialorder %v1074, 0.0
    %v1127 = vsel %vm1123, %v1071, %v1119
    %v1128 = vsel %vm1124, %v1072, %v1120
    %v1129 = vsel %vm1125, %v1073, %v1121
    %v1130 = vsel %vm1126, %v1074, %v1122
    %v1131 = vmul.f32 %v1127, %v451
    %v1132 = vmul.f32 %v1128, %v452
    %v1133 = vmul.f32 %v1129, %v453
    %v1134 = vmul.f32 %v1130, %v454
    %v1135 = vadd.f32 %v1131, %v1132
    %v1136 = vadd.f32 %v1135, %v1133
    %v1137 = vadd.f32 %v1136, %v1134
    %v1138 = vrot.slane %v1137, 4
    %v1139 = vadd.f32 %v1137, %v1138
    %v1140 = vrot.slane %v1139, 2
    %v1141 = vadd.f32 %v1139, %v1140
    %v1142 = vrot.slane %v1141, 1
    %v1143 = vadd.f32 %v1141, %v1142
    %v1144 = vadd.f32 %v1143, %v503
    %1145 = vst [vmem:[#allocation3 + $0x5] sm:$0x1] %v1144
    %v1146 = vperm.slane %v31, 6
    %v1147 = vmul.f32 %v1146, %v435
    %v1148 = vmul.f32 %v1146, %v436
    %v1149 = vmul.f32 %v1146, %v437
    %v1150 = vmul.f32 %v1146, %v438
    %v1151 = vadd.f32 %v406, %v1147
    %v1152 = vadd.f32 %v408, %v1148
    %v1153 = vadd.f32 %v411, %v1149
    %v1154 = vadd.f32 %v413, %v1150
    %v1155 = vperm.slane %v32, 6
    %v1156 = vmul.f32 %v1155, %v439
    %v1157 = vmul.f32 %v1155, %v440
    %v1158 = vmul.f32 %v1155, %v441
    %v1159 = vmul.f32 %v1155, %v442
    %v1160 = vadd.f32 %v1151, %v1156
    %v1161 = vadd.f32 %v1152, %v1157
    %v1162 = vadd.f32 %v1153, %v1158
    %v1163 = vadd.f32 %v1154, %v1159
    %v1164 = vperm.slane %v33, 6
    %v1165 = vmul.f32 %v1164, %v443
    %v1166 = vmul.f32 %v1164, %v444
    %v1167 = vmul.f32 %v1164, %v445
    %v1168 = vmul.f32 %v1164, %v446
    %v1169 = vadd.f32 %v1160, %v1165
    %v1170 = vadd.f32 %v1161, %v1166
    %v1171 = vadd.f32 %v1162, %v1167
    %v1172 = vadd.f32 %v1163, %v1168
    %v1173 = vperm.slane %v34, 6
    %v1174 = vmul.f32 %v1173, %v447
    %v1175 = vmul.f32 %v1173, %v448
    %v1176 = vmul.f32 %v1173, %v449
    %v1177 = vmul.f32 %v1173, %v450
    %v1178 = vadd.f32 %v1169, %v1174
    %v1179 = vadd.f32 %v1170, %v1175
    %v1180 = vadd.f32 %v1171, %v1176
    %v1181 = vadd.f32 %v1172, %v1177
    %v1182 = vmul.f32 %v1178, 0.041666668
    %v1183 = vmul.f32 %v1179, 0.041666668
    %v1184 = vmul.f32 %v1180, 0.041666668
    %v1185 = vmul.f32 %v1181, 0.041666668
    %v1186 = vadd.f32 %v1182, 0.16666667
    %v1187 = vadd.f32 %v1183, 0.16666667
    %v1188 = vadd.f32 %v1184, 0.16666667
    %v1189 = vadd.f32 %v1185, 0.16666667
    %v1190 = vmul.f32 %v1178, %v1186
    %v1191 = vmul.f32 %v1179, %v1187
    %v1192 = vmul.f32 %v1180, %v1188
    %v1193 = vmul.f32 %v1181, %v1189
    %v1194 = vadd.f32 %v1190, 0.5
    %v1195 = vadd.f32 %v1191, 0.5
    %v1196 = vadd.f32 %v1192, 0.5
    %v1197 = vadd.f32 %v1193, 0.5
    %v1198 = vmul.f32 %v1178, %v1194
    %v1199 = vmul.f32 %v1179, %v1195
    %v1200 = vmul.f32 %v1180, %v1196
    %v1201 = vmul.f32 %v1181, %v1197
    %v1202 = vadd.f32 %v1198, 1.0
    %v1203 = vadd.f32 %v1199, 1.0
    %v1204 = vadd.f32 %v1200, 1.0
    %v1205 = vadd.f32 %v1201, 1.0
    %v1206 = vmul.f32 %v1178, %v1202
    %v1207 = vmul.f32 %v1179, %v1203
    %v1208 = vmul.f32 %v1180, %v1204
    %v1209 = vmul.f32 %v1181, %v1205
    %vm1210 = vcmp.gt.f32.partialorder %v1178, -0.0625
    %vm1211 = vcmp.gt.f32.partialorder %v1179, -0.0625
    %vm1212 = vcmp.gt.f32.partialorder %v1180, -0.0625
    %vm1213 = vcmp.gt.f32.partialorder %v1181, -0.0625
    %v1214 = vmul.f32 %v1178, 1.442695
    %v1215 = vpow.pop %v1214
    %v1216 = vmul.f32 %v1179, 1.442695
    %v1217 = vpow.pop %v1216
    %v1218 = vmul.f32 %v1180, 1.442695
    %v1219 = vpow.pop %v1218
    %v1220 = vmul.f32 %v1181, 1.442695
    %v1221 = vpow.pop %v1220
    %v1222 = vsub.f32 %v1215, 1.0
    %v1223 = vsub.f32 %v1217, 1.0
    %v1224 = vsub.f32 %v1219, 1.0
    %v1225 = vsub.f32 %v1221, 1.0
    %v1226 = vsel %vm1210, %v1206, %v1222
    %v1227 = vsel %vm1211, %v1207, %v1223
    %v1228 = vsel %vm1212, %v1208, %v1224
    %v1229 = vsel %vm1213, %v1209, %v1225
    %vm1230 = vcmp.gt.f32.partialorder %v1178, 0.0
    %vm1231 = vcmp.gt.f32.partialorder %v1179, 0.0
    %vm1232 = vcmp.gt.f32.partialorder %v1180, 0.0
    %vm1233 = vcmp.gt.f32.partialorder %v1181, 0.0
    %v1234 = vsel %vm1230, %v1178, %v1226
    %v1235 = vsel %vm1231, %v1179, %v1227
    %v1236 = vsel %vm1232, %v1180, %v1228
    %v1237 = vsel %vm1233, %v1181, %v1229
    %v1238 = vmul.f32 %v1234, %v451
    %v1239 = vmul.f32 %v1235, %v452
    %v1240 = vmul.f32 %v1236, %v453
    %v1241 = vmul.f32 %v1237, %v454
    %v1242 = vadd.f32 %v1238, %v1239
    %v1243 = vadd.f32 %v1242, %v1240
    %v1244 = vadd.f32 %v1243, %v1241
    %v1245 = vrot.slane %v1244, 4
    %v1246 = vadd.f32 %v1244, %v1245
    %v1247 = vrot.slane %v1246, 2
    %v1248 = vadd.f32 %v1246, %v1247
    %v1249 = vrot.slane %v1248, 1
    %v1250 = vadd.f32 %v1248, %v1249
    %v1251 = vadd.f32 %v1250, %v503
    %1252 = vst [vmem:[#allocation3 + $0x6] sm:$0x1] %v1251
    %v1253 = vperm.slane %v31, 7
    %v1254 = vmul.f32 %v1253, %v435
    %v1255 = vmul.f32 %v1253, %v436
    %v1256 = vmul.f32 %v1253, %v437
    %v1257 = vmul.f32 %v1253, %v438
    %v1258 = vadd.f32 %v406, %v1254
    %v1259 = vadd.f32 %v408, %v1255
    %v1260 = vadd.f32 %v411, %v1256
    %v1261 = vadd.f32 %v413, %v1257
    %v1262 = vperm.slane %v32, 7
    %v1263 = vmul.f32 %v1262, %v439
    %v1264 = vmul.f32 %v1262, %v440
    %v1265 = vmul.f32 %v1262, %v441
    %v1266 = vmul.f32 %v1262, %v442
    %v1267 = vadd.f32 %v1258, %v1263
    %v1268 = vadd.f32 %v1259, %v1264
    %v1269 = vadd.f32 %v1260, %v1265
    %v1270 = vadd.f32 %v1261, %v1266
    %v1271 = vperm.slane %v33, 7
    %v1272 = vmul.f32 %v1271, %v443
    %v1273 = vmul.f32 %v1271, %v444
    %v1274 = vmul.f32 %v1271, %v445
    %v1275 = vmul.f32 %v1271, %v446
    %v1276 = vadd.f32 %v1267, %v1272
    %v1277 = vadd.f32 %v1268, %v1273
    %v1278 = vadd.f32 %v1269, %v1274
    %v1279 = vadd.f32 %v1270, %v1275
    %v1280 = vperm.slane %v34, 7
    %v1281 = vmul.f32 %v1280, %v447
    %v1282 = vmul.f32 %v1280, %v448
    %v1283 = vmul.f32 %v1280, %v449
    %v1284 = vmul.f32 %v1280, %v450
    %v1285 = vadd.f32 %v1276, %v1281
    %v1286 = vadd.f32 %v1277, %v1282
    %v1287 = vadd.f32 %v1278, %v1283
    %v1288 = vadd.f32 %v1279, %v1284
    %v1289 = vmul.f32 %v1285, 0.041666668
    %v1290 = vmul.f32 %v1286, 0.041666668
    %v1291 = vmul.f32 %v1287, 0.041666668
    %v1292 = vmul.f32 %v1288, 0.041666668
    %v1293 = vadd.f32 %v1289, 0.16666667
    %v1294 = vadd.f32 %v1290, 0.16666667
    %v1295 = vadd.f32 %v1291, 0.16666667
    %v1296 = vadd.f32 %v1292, 0.16666667
    %v1297 = vmul.f32 %v1285, %v1293
    %v1298 = vmul.f32 %v1286, %v1294
    %v1299 = vmul.f32 %v1287, %v1295
    %v1300 = vmul.f32 %v1288, %v1296
    %v1301 = vadd.f32 %v1297, 0.5
    %v1302 = vadd.f32 %v1298, 0.5
    %v1303 = vadd.f32 %v1299, 0.5
    %v1304 = vadd.f32 %v1300, 0.5
    %v1305 = vmul.f32 %v1285, %v1301
    %v1306 = vmul.f32 %v1286, %v1302
    %v1307 = vmul.f32 %v1287, %v1303
    %v1308 = vmul.f32 %v1288, %v1304
    %v1309 = vadd.f32 %v1305, 1.0
    %v1310 = vadd.f32 %v1306, 1.0
    %v1311 = vadd.f32 %v1307, 1.0
    %v1312 = vadd.f32 %v1308, 1.0
    %v1313 = vmul.f32 %v1285, %v1309
    %v1314 = vmul.f32 %v1286, %v1310
    %v1315 = vmul.f32 %v1287, %v1311
    %v1316 = vmul.f32 %v1288, %v1312
    %vm1317 = vcmp.gt.f32.partialorder %v1285, -0.0625
    %vm1318 = vcmp.gt.f32.partialorder %v1286, -0.0625
    %vm1319 = vcmp.gt.f32.partialorder %v1287, -0.0625
    %vm1320 = vcmp.gt.f32.partialorder %v1288, -0.0625
    %v1321 = vmul.f32 %v1285, 1.442695
    %v1322 = vpow.pop %v1321
    %v1323 = vmul.f32 %v1286, 1.442695
    %v1324 = vpow.pop %v1323
    %v1325 = vmul.f32 %v1287, 1.442695
    %v1326 = vpow.pop %v1325
    %v1327 = vmul.f32 %v1288, 1.442695
    %v1328 = vpow.pop %v1327
    %v1329 = vsub.f32 %v1322, 1.0
    %v1330 = vsub.f32 %v1324, 1.0
    %v1331 = vsub.f32 %v1326, 1.0
    %v1332 = vsub.f32 %v1328, 1.0
    %v1333 = vsel %vm1317, %v1313, %v1329
    %v1334 = vsel %vm1318, %v1314, %v1330
    %v1335 = vsel %vm1319, %v1315, %v1331
    %v1336 = vsel %vm1320, %v1316, %v1332
    %vm1337 = vcmp.gt.f32.partialorder %v1285, 0.0
    %vm1338 = vcmp.gt.f32.partialorder %v1286, 0.0
    %vm1339 = vcmp.gt.f32.partialorder %v1287, 0.0
    %vm1340 = vcmp.gt.f32.partialorder %v1288, 0.0
    %v1341 = vsel %vm1337, %v1285, %v1333
    %v1342 = vsel %vm1338, %v1286, %v1334
    %v1343 = vsel %vm1339, %v1287, %v1335
    %v1344 = vsel %vm1340, %v1288, %v1336
    %v1345 = vmul.f32 %v1341, %v451
    %v1346 = vmul.f32 %v1342, %v452
    %v1347 = vmul.f32 %v1343, %v453
    %v1348 = vmul.f32 %v1344, %v454
    %v1349 = vadd.f32 %v1345, %v1346
    %v1350 = vadd.f32 %v1349, %v1347
    %v1351 = vadd.f32 %v1350, %v1348
    %v1352 = vrot.slane %v1351, 4
    %v1353 = vadd.f32 %v1351, %v1352
    %v1354 = vrot.slane %v1353, 2
    %v1355 = vadd.f32 %v1353, %v1354
    %v1356 = vrot.slane %v1355, 1
    %v1357 = vadd.f32 %v1355, %v1356
    %v1358 = vadd.f32 %v1357, %v503
    %1359 = vst [vmem:[#allocation3 + $0x7] sm:$0x1] %v1358
    // Predicated region
    $region26: #{tpu_custom_call.1} parent=1 // pred_check
      _
    $region27: #{tpu_custom_call.1} parent=1 // pred_check_branch
      %1361 = sbr.rel (0) target = $region29
    $region28: #{tpu_custom_call.1} parent=1 // pred_region
      %1363 = vsyncadd [#allocation4], 0
      %s1365 = sshll.u32 [#allocation3], 4
      %s1366 = int_to_ptr.vmem [resolvable:$true] %s1365
      %s1367 = sshll.u32 %s6, 4
      %s1368 = int_to_ptr.hbm [resolvable:$true] %s1367
      %1370 = dma.vmem_to_hbm [thread:$0]  %s1366, 128, %s1368, [#allocation4]
    $region29: #{tpu_custom_call.1} parent=1 // pred_fallthru
      _
    // Predicated region
    $region30: #{tpu_custom_call.1} parent=1 // pred_check
      _
    $region31: #{tpu_custom_call.1} parent=1 // pred_check_branch
      %1372 = sbr.rel (0) target = $region33
    $region32: #{tpu_custom_call.1} parent=1 // pred_region
      %1374 = dma.done [#allocation4], 128
    $region33: #{tpu_custom_call.1} parent=1 // pred_fallthru
      _
    %1375 = vsyncpa [#allocation4], 1

</llo_original>
